<compile_context>
chip_gen: v5e
topology: v5e:2x2
jax: 0.10.0
libtpu: 0.0.40
codegen_flags: <defaults>
</compile_context>

<pallas_src>
import jax
import jax.numpy as jnp
from jax import lax
from jax.experimental import pallas as pl
from jax.experimental.pallas import tpu as pltpu

EPS = 0.01  # BatchNorm eps from build_norm_layer


def _full_spec(shape):
    """Whole-array block, revisited (constant index map) across the grid."""
    zeros = (0,) * len(shape)
    return pl.BlockSpec(shape, lambda g: zeros)


def _make_kernels(H, W, Cmid, dilation, nb):
    Cout = 2 * Cmid
    HW = H * W
    inv_hw = 1.0 / float(HW)

    def edge_masks(hh, ww, d):
        """{0,1} float masks (1, HW) for the 8 non-centre taps of a 3x3 dw conv."""
        masks = []
        for i in (-1, 0, 1):
            for j in (-1, 0, 1):
                if i == 0 and j == 0:
                    masks.append(None)
                    continue
                ok = None
                if i < 0:
                    ok = hh >= (-i) * d
                elif i > 0:
                    ok = hh < H - i * d
                if j < 0:
                    c = ww >= (-j) * d
                    ok = c if ok is None else ok & c
                elif j > 0:
                    c = ww < W - j * d
                    ok = c if ok is None else ok & c
                masks.append(ok.astype(jnp.float32))
        return masks

    def dw3x3(y, wdw, masks, base, d):
        """Depthwise 3x3 (dilation d, zero pad d) on channel-major (Cmid, HW).

        Each non-centre tap: lane-roll (XLU slot) + {0,1} edge mask + MAC with
        the per-channel tap weight.  The centre tap initialises the accumulator.
        """
        acc = y * wdw[:, base + 4:base + 5]            # centre tap, no zero-fill
        t = -1
        for i in (-1, 0, 1):
            for j in (-1, 0, 1):
                t += 1
                if i == 0 and j == 0:
                    continue
                shift = i * d * W + j * d
                src = pltpu.roll(y, (-shift) % HW, axis=1) * masks[t]
                acc = acc + src * wdw[:, base + t:base + t + 1]
        return acc

    def kernel_a(x_ref, w1t_ref, b1_ref, y_ref, st_ref):
        # Pass 1: conv1x1 once per sample; cache raw y; fused per-block
        # per-channel sum / sum-of-squares for global BN1 statistics.
        w1t = w1t_ref[...]
        b1 = b1_ref[...]
        s1 = jnp.zeros((Cmid, 1), jnp.float32)
        q1 = jnp.zeros((Cmid, 1), jnp.float32)
        for n in range(nb):                             # static unroll, nb small
            y = jnp.dot(w1t, x_ref[n], preferred_element_type=jnp.float32) + b1
            y_ref[n] = y
            s1 = s1 + jnp.sum(y, axis=1, keepdims=True)
            q1 = q1 + jnp.sum(y * y, axis=1, keepdims=True)
        st_ref[0] = jnp.concatenate([s1, q1], axis=1)

    def kernel_b(y_ref, bn1_ref, wdw_ref, coords_ref, joi_ref, st_ref):
        # Pass 2: global BN1 affine + PReLU1 on cached y, both dw convs once,
        # cache joined loc|sur, fused sums for global BN2 statistics.
        bn1 = bn1_ref[...]                  # (Cmid, 3): [scale1, shift1, alpha1]
        wdw = wdw_ref[...]                  # (Cmid, 18): loc taps | sur taps
        hh = coords_ref[0:1, :]             # (1, HW) row index per lane
        ww = coords_ref[1:2, :]             # (1, HW) col index per lane
        m_loc = edge_masks(hh, ww, 1)       # hoisted out of the sample loop
        m_sur = edge_masks(hh, ww, dilation)
        s_l = jnp.zeros((Cmid, 1), jnp.float32)
        q_l = jnp.zeros((Cmid, 1), jnp.float32)
        s_s = jnp.zeros((Cmid, 1), jnp.float32)
        q_s = jnp.zeros((Cmid, 1), jnp.float32)
        for n in range(nb):
            y = y_ref[n]                                     # cached conv1x1 out
            y = y * bn1[:, 0:1] + bn1[:, 1:2]                # BN1 (global affine)
            y = jnp.where(y > 0, y, bn1[:, 2:3] * y)         # PReLU1
            loc = dw3x3(y, wdw, m_loc, 0, 1)
            sur = dw3x3(y, wdw, m_sur, 9, dilation)
            joi_ref[n, :Cmid, :] = loc
            joi_ref[n, Cmid:, :] = sur
            s_l = s_l + jnp.sum(loc, axis=1, keepdims=True)
            q_l = q_l + jnp.sum(loc * loc, axis=1, keepdims=True)
            s_s = s_s + jnp.sum(sur, axis=1, keepdims=True)
            q_s = q_s + jnp.sum(sur * sur, axis=1, keepdims=True)
        st_ref[0] = jnp.concatenate([s_l, q_l, s_s, q_s], axis=1)

    def kernel_c(joi_ref, x_ref, bn2_ref, fw1t_ref, fb1_ref, fw2t_ref, fb2_ref,
                 o_ref):
        # Pass 3: BN2 + PReLU2 on cached loc|sur, batched SE FCs, SE scale +
        # skip, lane-dense (Cout, HW) stores.  No conv recompute.
        bn2 = bn2_ref[...]                  # (Cout, 3): [scale2, shift2, alpha2]
        scale, shift, alpha = bn2[:, 0:1], bn2[:, 1:2], bn2[:, 2:3]
        jois = []
        pooled_cols = []
        for n in range(nb):
            j = joi_ref[n]                                   # (Cout, HW)
            j = j * scale + shift                            # BN2 (global affine)
            j = jnp.where(j > 0, j, alpha * j)               # PReLU2
            jois.append(j)
            pooled_cols.append(jnp.sum(j, axis=1, keepdims=True) * inv_hw)
        pooled = jnp.concatenate(pooled_cols, axis=1)        # (Cout, nb)
        # Global context extractor, batched over the nb samples in this block.
        h1 = jnp.maximum(
            jnp.dot(fw1t_ref[...], pooled,
                    preferred_element_type=jnp.float32) + fb1_ref[...], 0.0)
        s = jax.nn.sigmoid(
            jnp.dot(fw2t_ref[...], h1,
                    preferred_element_type=jnp.float32) + fb2_ref[...])  # (Cout, nb)
        for n in range(nb):
            o_ref[n] = jois[n] * s[:, n:n + 1] + x_ref[n]    # SE scale + skip

    return kernel_a, kernel_b, kernel_c


def context_guided_block(x_nchw, p, *, dilation=2):
    """x_nchw: (N, Cin, H, W) float32; returns (N, Cout, H, W) float32."""
    N, Cin, H, W = x_nchw.shape
    Cmid = p["w1"].shape[1]
    Cout = 2 * Cmid
    assert Cin == Cout, "skip_connect & no downsample require Cin == Cout"
    HW = H * W
    cnt = float(N * HW)
    f32 = jnp.float32

    # Channel-major, lane-dense layout: just a reshape of NCHW (no transpose).
    x = x_nchw.astype(f32).reshape(N, Cin, HW)

    # Pre-packed parameters (all layout work hoisted out of the kernels).
    w1t = p["w1"].T.astype(f32)                                    # (Cmid, Cin)
    b1c = p["b1"].T.astype(f32)                                    # (Cmid, 1)
    wdw = jnp.concatenate([p["wloc"].T, p["wsur"].T], axis=1).astype(f32)  # (Cmid, 18)
    fw1t = p["fw1"].T.astype(f32)                                  # (Cr, Cout)
    fb1c = p["fb1"].T.astype(f32)                                  # (Cr, 1)
    fw2t = p["fw2"].T.astype(f32)                                  # (Cout, Cr)
    fb2c = p["fb2"].T.astype(f32)                                  # (Cout, 1)
    Cr = fw1t.shape[0]

    # Tiny (2, HW) int32 coordinate table replaces the (18, HW) f32 mask buffer.
    lin = jnp.arange(HW, dtype=jnp.int32)
    coords = jnp.stack([lin // W, lin % W], axis=0)                # (2, HW)

    # ---- per-grid-step sample batching & VMEM budget -------------------------
    # Conservative per-sample working-set estimate for the heaviest pass
    # (double-buffered blocks + in-kernel temporaries).
    per_sample_bytes = 16 * Cout * HW * 4
    vmem_budget = 12 * 1024 * 1024          # conservative across v5e/v6e/v7x
    vmem_limit = 32 * 1024 * 1024           # < v7x 64 MiB physical, > v5e default
    nb = max(1, min(N, vmem_budget // per_sample_bytes))
    while N % nb:
        nb -= 1
    G = N // nb
    assert nb * per_sample_bytes <= vmem_limit, (
        "per-step working set exceeds the VMEM budget; an H-row-tile grid axis "
        "with 2*dilation halo rows is required at this resolution")
    # TODO(synk): add an H-tile grid axis (halo = 2*dilation rows) for CGNet-scale
    # resolutions where even a single sample no longer fits the per-step budget.

    kernel_a, kernel_b, kernel_c = _make_kernels(H, W, Cmid, dilation, nb)

    x_spec = pl.BlockSpec((nb, Cin, HW), lambda g: (g, 0, 0))
    y_spec = pl.BlockSpec((nb, Cmid, HW), lambda g: (g, 0, 0))
    joi_spec = pl.BlockSpec((nb, Cout, HW), lambda g: (g, 0, 0))
    cparams = pltpu.CompilerParams(dimension_semantics=("parallel",),
                                   vmem_limit_bytes=vmem_limit)

    # ---- pass 1: conv1x1 (once), cache y, BN1 sum/sumsq ----------------------
    y_cache, stats1 = pl.pallas_call(
        kernel_a,
        out_shape=(jax.ShapeDtypeStruct((N, Cmid, HW), f32),
                   jax.ShapeDtypeStruct((G, Cmid, 2), f32)),
        grid=(G,),
        in_specs=[x_spec, _full_spec((Cmid, Cin)), _full_spec((Cmid, 1))],
        out_specs=(y_spec, pl.BlockSpec((1, Cmid, 2), lambda g: (g, 0, 0))),
        compiler_params=cparams,
    )(x, w1t, b1c)

    s1 = jnp.sum(stats1, axis=0)                    # (Cmid, 2) global sums
    mu1 = s1[:, 0] / cnt
    var1 = jnp.maximum(s1[:, 1] / cnt - mu1 * mu1, 0.0)
    scale1 = p["g1"][0] * lax.rsqrt(var1 + EPS)
    shift1 = p["be1"][0] - mu1 * scale1
    bn1 = jnp.stack([scale1, shift1, p["a1"][0]], axis=1).astype(f32)   # (Cmid, 3)

    # ---- pass 2: BN1+PReLU1, both dw convs (once), cache loc|sur, BN2 sums ---
    joi, stats2 = pl.pallas_call(
        kernel_b,
        out_shape=(jax.ShapeDtypeStruct((N, Cout, HW), f32),
                   jax.ShapeDtypeStruct((G, Cmid, 4), f32)),
        grid=(G,),
        in_specs=[y_spec, _full_spec((Cmid, 3)), _full_spec((Cmid, 18)),
                  _full_spec((2, HW))],
        out_specs=(joi_spec, pl.BlockSpec((1, Cmid, 4), lambda g: (g, 0, 0))),
        compiler_params=cparams,
    )(y_cache, bn1, wdw, coords)

    s2 = jnp.sum(stats2, axis=0)                    # (Cmid, 4) global sums
    mu_l = s2[:, 0] / cnt
    var_l = jnp.maximum(s2[:, 1] / cnt - mu_l * mu_l, 0.0)
    mu_s = s2[:, 2] / cnt
    var_s = jnp.maximum(s2[:, 3] / cnt - mu_s * mu_s, 0.0)
    mu2 = jnp.concatenate([mu_l, mu_s], axis=0)
    var2 = jnp.concatenate([var_l, var_s], axis=0)
    scale2 = p["g2"][0] * lax.rsqrt(var2 + EPS)
    shift2 = p["be2"][0] - mu2 * scale2
    bn2 = jnp.stack([scale2, shift2, p["a2"][0]], axis=1).astype(f32)   # (Cout, 3)

    # ---- pass 3: BN2+PReLU2, SE gate, skip; lane-dense output ----------------
    out = pl.pallas_call(
        kernel_c,
        out_shape=jax.ShapeDtypeStruct((N, Cout, HW), f32),
        grid=(G,),
        in_specs=[joi_spec, x_spec, _full_spec((Cout, 3)),
                  _full_spec((Cr, Cout)), _full_spec((Cr, 1)),
                  _full_spec((Cout, Cr)), _full_spec((Cout, 1))],
        out_specs=joi_spec,
        compiler_params=cparams,
    )(joi, x, bn2, fw1t, fb1c, fw2t, fb2c)

    return out.reshape(N, Cout, H, W)


def reference(x_nchw, p):
    """Pure-JAX reference with identical semantics (for validation)."""
    x = jnp.transpose(x_nchw, (0, 2, 3, 1)).astype(jnp.float32)
    N, H, W, Cin = x.shape
    Cmid = p["w1"].shape[1]

    y = jnp.einsum("nhwc,cd->nhwd", x, p["w1"],
                   precision=lax.Precision.HIGHEST) + p["b1"][0]
    mu = y.mean(axis=(0, 1, 2))
    var = y.var(axis=(0, 1, 2))
    y = (y - mu) / jnp.sqrt(var + EPS) * p["g1"][0] + p["be1"][0]
    y = jnp.where(y > 0, y, p["a1"][0] * y)

    def dw(inp, w9, d):
        rhs = w9.reshape(3, 3, 1, Cmid)
        return lax.conv_general_dilated(
            inp, rhs, window_strides=(1, 1), padding=((d, d), (d, d)),
            rhs_dilation=(d, d),
            dimension_numbers=("NHWC", "HWIO", "NHWC"),
            feature_group_count=Cmid,
            precision=lax.Precision.HIGHEST)

    loc = dw(y, p["wloc"], 1)
    sur = dw(y, p["wsur"], 2)
    joi = jnp.concatenate([loc, sur], axis=-1)
    mu2 = joi.mean(axis=(0, 1, 2))
    var2 = joi.var(axis=(0, 1, 2))
    joi = (joi - mu2) / jnp.sqrt(var2 + EPS) * p["g2"][0] + p["be2"][0]
    joi = jnp.where(joi > 0, joi, p["a2"][0] * joi)

    pooled = joi.mean(axis=(1, 2))
    h = jnp.maximum(
        jnp.dot(pooled, p["fw1"], precision=lax.Precision.HIGHEST) + p["fb1"][0], 0.0)
    s = jax.nn.sigmoid(
        jnp.dot(h, p["fw2"], precision=lax.Precision.HIGHEST) + p["fb2"][0])
    out = joi * s[:, None, None, :] + x
    return jnp.transpose(out, (0, 3, 1, 2))


def make_params(key, in_channels, out_channels, reduction=16):
    channels = out_channels // 2                     # Cmid
    cr = out_channels // reduction
    ks = jax.random.split(key, 16)
    f32 = jnp.float32
    p = {
        # conv1x1: (Cin, Cmid) pointwise weight + bias
        "w1":   0.2 * jax.random.normal(ks[0], (in_channels, channels), f32),
        "b1":   0.1 * jax.random.normal(ks[1], (1, channels), f32),
        # BN1 (gamma, beta) + PReLU1 alpha
        "g1":   1.0 + 0.1 * jax.random.normal(ks[2], (1, channels), f32),
        "be1":  0.1 * jax.random.normal(ks[3], (1, channels), f32),
        "a1":   0.25 + 0.05 * jax.random.normal(ks[4], (1, channels), f32),
        # depthwise 3x3 weights, (9, Cmid) row-major taps
        "wloc": 0.2 * jax.random.normal(ks[5], (9, channels), f32),
        "wsur": 0.2 * jax.random.normal(ks[6], (9, channels), f32),
        # BN2 + PReLU2 on joined features (2*Cmid == Cout)
        "g2":   1.0 + 0.1 * jax.random.normal(ks[7], (1, out_channels), f32),
        "be2":  0.1 * jax.random.normal(ks[8], (1, out_channels), f32),
        "a2":   0.25 + 0.05 * jax.random.normal(ks[9], (1, out_channels), f32),
        # GlobalContextExtractor FC weights (already transposed to in x out)
        "fw1":  0.3 * jax.random.normal(ks[10], (out_channels, cr), f32),
        "fb1":  0.1 * jax.random.normal(ks[11], (1, cr), f32),
        "fw2":  0.3 * jax.random.normal(ks[12], (cr, out_channels), f32),
        "fb2":  0.1 * jax.random.normal(ks[13], (1, out_channels), f32),
    }
    return p


if __name__ == "__main__":
    # skip_connect=True and downsample=False => in_channels == out_channels.
    # reduction=16 => out_channels must be >= 16.
    N, C, H, W = 2, 32, 16, 16
    key = jax.random.PRNGKey(0)
    kx, kp = jax.random.split(key)
    x = jax.random.normal(kx, (N, C, H, W), jnp.float32)
    params = make_params(kp, in_channels=C, out_channels=C, reduction=16)

    run = jax.jit(context_guided_block)
    out = jax.block_until_ready(run(x, params))

    ref = jax.block_until_ready(reference(x, params))
    assert out.shape == (N, C, H, W), out.shape
    max_err = float(jnp.max(jnp.abs(out - ref)))
    assert max_err < 1e-2, f"mismatch vs reference, max_err={max_err}"

    print("KERNEL_OK")
</pallas_src>

<mosaic_0001>
module attributes {stable_mosaic.version = 11 : i64} {
  func.func @kernel_a(%arg0: i32, %arg1: memref<2x32x256xf32, #tpu.memory_space<vmem>>, %arg2: memref<16x32xf32, #tpu.memory_space<vmem>>, %arg3: memref<16x1xf32, #tpu.memory_space<vmem>>, %arg4: memref<2x16x256xf32, #tpu.memory_space<vmem>>, %arg5: memref<1x16x2xf32, #tpu.memory_space<vmem>>) attributes {dimension_semantics = [#tpu.dimension_semantics<parallel>], iteration_bounds = array<i64: 1>, scalar_prefetch = 0 : i64, scratch_operands = 0 : i64, tpu.core_type = #tpu.core_type<tc>, window_params = [{transform_indices = @transform_0, window_bounds = array<i64: 2, 32, 256>}, {pipeline_mode = #tpu.pipeline_mode<synchronous>, transform_indices = @transform_1, window_bounds = array<i64: 16, 32>}, {pipeline_mode = #tpu.pipeline_mode<synchronous>, transform_indices = @transform_2, window_bounds = array<i64: 16, 1>}, {transform_indices = @transform_3, window_bounds = array<i64: 2, 16, 256>}, {transform_indices = @transform_4, window_bounds = array<i64: 1, 16, 2>}]} {
    %c0 = arith.constant 0 : index
    %c0_0 = arith.constant 0 : index
    %0 = vector.load %arg2[%c0, %c0_0] : memref<16x32xf32, #tpu.memory_space<vmem>>, vector<16x32xf32>
    %c0_1 = arith.constant 0 : index
    %c0_2 = arith.constant 0 : index
    %1 = vector.load %arg3[%c0_1, %c0_2] : memref<16x1xf32, #tpu.memory_space<vmem>>, vector<16x1xf32>
    %cst = arith.constant 0.000000e+00 : f32
    %2 = vector.broadcast %cst : f32 to vector<16x1xf32>
    %cst_3 = arith.constant 0.000000e+00 : f32
    %3 = vector.broadcast %cst_3 : f32 to vector<16x1xf32>
    %c0_4 = arith.constant 0 : index
    %c0_5 = arith.constant 0 : index
    %c0_6 = arith.constant 0 : index
    %4 = vector.load %arg1[%c0_4, %c0_5, %c0_6] : memref<2x32x256xf32, #tpu.memory_space<vmem>>, vector<1x32x256xf32>
    %5 = vector.shape_cast %4 : vector<1x32x256xf32> to vector<32x256xf32>
    %cst_7 = arith.constant dense<0.000000e+00> : vector<16x256xf32>
    %6 = tpu.matmul %0, %5, %cst_7 {dimension_numbers = #tpu.dot_dimension_numbers<[1], [0], [0], [1], [0, 0, 1, 1], [], []>} : vector<16x32xf32>, vector<32x256xf32>, vector<16x256xf32> -> vector<16x256xf32>
    %7 = vector.broadcast %1 : vector<16x1xf32> to vector<16x256xf32>
    %8 = arith.addf %6, %7 : vector<16x256xf32>
    %c0_8 = arith.constant 0 : index
    %c0_9 = arith.constant 0 : index
    %c0_10 = arith.constant 0 : index
    %9 = vector.load %arg4[%c0_8, %c0_9, %c0_10] : memref<2x16x256xf32, #tpu.memory_space<vmem>>, vector<1x16x256xf32>
    %10 = vector.shape_cast %9 : vector<1x16x256xf32> to vector<16x256xf32>
    %11 = vector.shape_cast %8 : vector<16x256xf32> to vector<1x16x256xf32>
    tpu.vector_store %arg4[%c0_8, %c0_9, %c0_10], %11 {strides = array<i32>} : memref<2x16x256xf32, #tpu.memory_space<vmem>>, vector<1x16x256xf32>,
    %cst_11 = arith.constant dense<0.000000e+00> : vector<16xf32>
    %12 = vector.multi_reduction <add>, %8, %cst_11 [1] : vector<16x256xf32> to vector<16xf32>
    %13 = vector.shape_cast %12 : vector<16xf32> to vector<16x1xf32>
    %14 = arith.addf %2, %13 : vector<16x1xf32>
    %15 = arith.mulf %8, %8 : vector<16x256xf32>
    %cst_12 = arith.constant dense<0.000000e+00> : vector<16xf32>
    %16 = vector.multi_reduction <add>, %15, %cst_12 [1] : vector<16x256xf32> to vector<16xf32>
    %17 = vector.shape_cast %16 : vector<16xf32> to vector<16x1xf32>
    %18 = arith.addf %3, %17 : vector<16x1xf32>
    %c1 = arith.constant 1 : index
    %c0_13 = arith.constant 0 : index
    %c0_14 = arith.constant 0 : index
    %19 = vector.load %arg1[%c1, %c0_13, %c0_14] : memref<2x32x256xf32, #tpu.memory_space<vmem>>, vector<1x32x256xf32>
    %20 = vector.shape_cast %19 : vector<1x32x256xf32> to vector<32x256xf32>
    %cst_15 = arith.constant dense<0.000000e+00> : vector<16x256xf32>
    %21 = tpu.matmul %0, %20, %cst_15 {dimension_numbers = #tpu.dot_dimension_numbers<[1], [0], [0], [1], [0, 0, 1, 1], [], []>} : vector<16x32xf32>, vector<32x256xf32>, vector<16x256xf32> -> vector<16x256xf32>
    %22 = vector.broadcast %1 : vector<16x1xf32> to vector<16x256xf32>
    %23 = arith.addf %21, %22 : vector<16x256xf32>
    %c1_16 = arith.constant 1 : index
    %c0_17 = arith.constant 0 : index
    %c0_18 = arith.constant 0 : index
    %24 = vector.load %arg4[%c1_16, %c0_17, %c0_18] : memref<2x16x256xf32, #tpu.memory_space<vmem>>, vector<1x16x256xf32>
    %25 = vector.shape_cast %24 : vector<1x16x256xf32> to vector<16x256xf32>
    %26 = vector.shape_cast %23 : vector<16x256xf32> to vector<1x16x256xf32>
    tpu.vector_store %arg4[%c1_16, %c0_17, %c0_18], %26 {strides = array<i32>} : memref<2x16x256xf32, #tpu.memory_space<vmem>>, vector<1x16x256xf32>,
    %cst_19 = arith.constant dense<0.000000e+00> : vector<16xf32>
    %27 = vector.multi_reduction <add>, %23, %cst_19 [1] : vector<16x256xf32> to vector<16xf32>
    %28 = vector.shape_cast %27 : vector<16xf32> to vector<16x1xf32>
    %29 = arith.addf %14, %28 : vector<16x1xf32>
    %30 = arith.mulf %23, %23 : vector<16x256xf32>
    %cst_20 = arith.constant dense<0.000000e+00> : vector<16xf32>
    %31 = vector.multi_reduction <add>, %30, %cst_20 [1] : vector<16x256xf32> to vector<16xf32>
    %32 = vector.shape_cast %31 : vector<16xf32> to vector<16x1xf32>
    %33 = arith.addf %18, %32 : vector<16x1xf32>
    %34 = tpu.concatenate %29, %33 in 1 : vector<16x1xf32>, vector<16x1xf32> -> vector<16x2xf32>
    %c0_21 = arith.constant 0 : index
    %c0_22 = arith.constant 0 : index
    %c0_23 = arith.constant 0 : index
    %35 = vector.load %arg5[%c0_21, %c0_22, %c0_23] : memref<1x16x2xf32, #tpu.memory_space<vmem>>, vector<1x16x2xf32>
    %36 = vector.shape_cast %35 : vector<1x16x2xf32> to vector<16x2xf32>
    %37 = vector.shape_cast %34 : vector<16x2xf32> to vector<1x16x2xf32>
    tpu.vector_store %arg5[%c0_21, %c0_22, %c0_23], %37 {strides = array<i32>} : memref<1x16x2xf32, #tpu.memory_space<vmem>>, vector<1x16x2xf32>,
    return
  }
  func.func @transform_0(%arg0: i32) -> (i32, i32, i32) {
    %c0_i32 = arith.constant 0 : i32
    %c0_i32_0 = arith.constant 0 : i32
    %c0_i32_1 = arith.constant 0 : i32
    return %arg0, %c0_i32, %c0_i32_0 : i32, i32, i32
  }
  func.func @transform_1(%arg0: i32) -> (i32, i32) {
    %c0_i32 = arith.constant 0 : i32
    %c0_i32_0 = arith.constant 0 : i32
    %c0_i32_1 = arith.constant 0 : i32
    return %c0_i32, %c0_i32_0 : i32, i32
  }
  func.func @transform_2(%arg0: i32) -> (i32, i32) {
    %c0_i32 = arith.constant 0 : i32
    %c0_i32_0 = arith.constant 0 : i32
    %c0_i32_1 = arith.constant 0 : i32
    return %c0_i32, %c0_i32_0 : i32, i32
  }
  func.func @transform_3(%arg0: i32) -> (i32, i32, i32) {
    %c0_i32 = arith.constant 0 : i32
    %c0_i32_0 = arith.constant 0 : i32
    %c0_i32_1 = arith.constant 0 : i32
    return %arg0, %c0_i32, %c0_i32_0 : i32, i32, i32
  }
  func.func @transform_4(%arg0: i32) -> (i32, i32, i32) {
    %c0_i32 = arith.constant 0 : i32
    %c0_i32_0 = arith.constant 0 : i32
    %c0_i32_1 = arith.constant 0 : i32
    return %arg0, %c0_i32, %c0_i32_0 : i32, i32, i32
  }
}

module attributes {stable_mosaic.version = 11 : i64} {
  func.func @kernel_b(%arg0: i32, %arg1: memref<2x16x256xf32, #tpu.memory_space<vmem>>, %arg2: memref<16x3xf32, #tpu.memory_space<vmem>>, %arg3: memref<16x18xf32, #tpu.memory_space<vmem>>, %arg4: memref<2x256xi32, #tpu.memory_space<vmem>>, %arg5: memref<2x32x256xf32, #tpu.memory_space<vmem>>, %arg6: memref<1x16x4xf32, #tpu.memory_space<vmem>>) attributes {dimension_semantics = [#tpu.dimension_semantics<parallel>], iteration_bounds = array<i64: 1>, scalar_prefetch = 0 : i64, scratch_operands = 0 : i64, tpu.core_type = #tpu.core_type<tc>, window_params = [{transform_indices = @transform_0, window_bounds = array<i64: 2, 16, 256>}, {pipeline_mode = #tpu.pipeline_mode<synchronous>, transform_indices = @transform_1, window_bounds = array<i64: 16, 3>}, {pipeline_mode = #tpu.pipeline_mode<synchronous>, transform_indices = @transform_2, window_bounds = array<i64: 16, 18>}, {pipeline_mode = #tpu.pipeline_mode<synchronous>, transform_indices = @transform_3, window_bounds = array<i64: 2, 256>}, {transform_indices = @transform_4, window_bounds = array<i64: 2, 32, 256>}, {transform_indices = @transform_5, window_bounds = array<i64: 1, 16, 4>}]} {
    %c0 = arith.constant 0 : index
    %c0_0 = arith.constant 0 : index
    %0 = vector.load %arg2[%c0, %c0_0] : memref<16x3xf32, #tpu.memory_space<vmem>>, vector<16x3xf32>
    %c0_1 = arith.constant 0 : index
    %c0_2 = arith.constant 0 : index
    %1 = vector.load %arg3[%c0_1, %c0_2] : memref<16x18xf32, #tpu.memory_space<vmem>>, vector<16x18xf32>
    %c0_3 = arith.constant 0 : index
    %c0_4 = arith.constant 0 : index
    %2 = vector.load %arg4[%c0_3, %c0_4] : memref<2x256xi32, #tpu.memory_space<vmem>>, vector<1x256xi32>
    %c1 = arith.constant 1 : index
    %c0_5 = arith.constant 0 : index
    %3 = vector.load %arg4[%c1, %c0_5] : memref<2x256xi32, #tpu.memory_space<vmem>>, vector<1x256xi32>
    %c1_i32 = arith.constant 1 : i32
    %4 = vector.broadcast %c1_i32 : i32 to vector<1x256xi32>
    %5 = arith.cmpi sge, %2, %4 : vector<1x256xi32>
    %c1_i32_6 = arith.constant 1 : i32
    %6 = vector.broadcast %c1_i32_6 : i32 to vector<1x256xi32>
    %7 = arith.cmpi sge, %3, %6 : vector<1x256xi32>
    %8 = arith.andi %5, %7 : vector<1x256xi1>
    %9 = arith.extui %8 : vector<1x256xi1> to vector<1x256xi32>
    %10 = arith.sitofp %9 : vector<1x256xi32> to vector<1x256xf32>
    %c1_i32_7 = arith.constant 1 : i32
    %11 = vector.broadcast %c1_i32_7 : i32 to vector<1x256xi32>
    %12 = arith.cmpi sge, %2, %11 : vector<1x256xi32>
    %13 = arith.extui %12 : vector<1x256xi1> to vector<1x256xi32>
    %14 = arith.sitofp %13 : vector<1x256xi32> to vector<1x256xf32>
    %c1_i32_8 = arith.constant 1 : i32
    %15 = vector.broadcast %c1_i32_8 : i32 to vector<1x256xi32>
    %16 = arith.cmpi sge, %2, %15 : vector<1x256xi32>
    %c15_i32 = arith.constant 15 : i32
    %17 = vector.broadcast %c15_i32 : i32 to vector<1x256xi32>
    %18 = arith.cmpi slt, %3, %17 : vector<1x256xi32>
    %19 = arith.andi %16, %18 : vector<1x256xi1>
    %20 = arith.extui %19 : vector<1x256xi1> to vector<1x256xi32>
    %21 = arith.sitofp %20 : vector<1x256xi32> to vector<1x256xf32>
    %c1_i32_9 = arith.constant 1 : i32
    %22 = vector.broadcast %c1_i32_9 : i32 to vector<1x256xi32>
    %23 = arith.cmpi sge, %3, %22 : vector<1x256xi32>
    %24 = arith.extui %23 : vector<1x256xi1> to vector<1x256xi32>
    %25 = arith.sitofp %24 : vector<1x256xi32> to vector<1x256xf32>
    %c15_i32_10 = arith.constant 15 : i32
    %26 = vector.broadcast %c15_i32_10 : i32 to vector<1x256xi32>
    %27 = arith.cmpi slt, %3, %26 : vector<1x256xi32>
    %28 = arith.extui %27 : vector<1x256xi1> to vector<1x256xi32>
    %29 = arith.sitofp %28 : vector<1x256xi32> to vector<1x256xf32>
    %c15_i32_11 = arith.constant 15 : i32
    %30 = vector.broadcast %c15_i32_11 : i32 to vector<1x256xi32>
    %31 = arith.cmpi slt, %2, %30 : vector<1x256xi32>
    %c1_i32_12 = arith.constant 1 : i32
    %32 = vector.broadcast %c1_i32_12 : i32 to vector<1x256xi32>
    %33 = arith.cmpi sge, %3, %32 : vector<1x256xi32>
    %34 = arith.andi %31, %33 : vector<1x256xi1>
    %35 = arith.extui %34 : vector<1x256xi1> to vector<1x256xi32>
    %36 = arith.sitofp %35 : vector<1x256xi32> to vector<1x256xf32>
    %c15_i32_13 = arith.constant 15 : i32
    %37 = vector.broadcast %c15_i32_13 : i32 to vector<1x256xi32>
    %38 = arith.cmpi slt, %2, %37 : vector<1x256xi32>
    %39 = arith.extui %38 : vector<1x256xi1> to vector<1x256xi32>
    %40 = arith.sitofp %39 : vector<1x256xi32> to vector<1x256xf32>
    %c15_i32_14 = arith.constant 15 : i32
    %41 = vector.broadcast %c15_i32_14 : i32 to vector<1x256xi32>
    %42 = arith.cmpi slt, %2, %41 : vector<1x256xi32>
    %c15_i32_15 = arith.constant 15 : i32
    %43 = vector.broadcast %c15_i32_15 : i32 to vector<1x256xi32>
    %44 = arith.cmpi slt, %3, %43 : vector<1x256xi32>
    %45 = arith.andi %42, %44 : vector<1x256xi1>
    %46 = arith.extui %45 : vector<1x256xi1> to vector<1x256xi32>
    %47 = arith.sitofp %46 : vector<1x256xi32> to vector<1x256xf32>
    %c2_i32 = arith.constant 2 : i32
    %48 = vector.broadcast %c2_i32 : i32 to vector<1x256xi32>
    %49 = arith.cmpi sge, %2, %48 : vector<1x256xi32>
    %c2_i32_16 = arith.constant 2 : i32
    %50 = vector.broadcast %c2_i32_16 : i32 to vector<1x256xi32>
    %51 = arith.cmpi sge, %3, %50 : vector<1x256xi32>
    %52 = arith.andi %49, %51 : vector<1x256xi1>
    %53 = arith.extui %52 : vector<1x256xi1> to vector<1x256xi32>
    %54 = arith.sitofp %53 : vector<1x256xi32> to vector<1x256xf32>
    %c2_i32_17 = arith.constant 2 : i32
    %55 = vector.broadcast %c2_i32_17 : i32 to vector<1x256xi32>
    %56 = arith.cmpi sge, %2, %55 : vector<1x256xi32>
    %57 = arith.extui %56 : vector<1x256xi1> to vector<1x256xi32>
    %58 = arith.sitofp %57 : vector<1x256xi32> to vector<1x256xf32>
    %c2_i32_18 = arith.constant 2 : i32
    %59 = vector.broadcast %c2_i32_18 : i32 to vector<1x256xi32>
    %60 = arith.cmpi sge, %2, %59 : vector<1x256xi32>
    %c14_i32 = arith.constant 14 : i32
    %61 = vector.broadcast %c14_i32 : i32 to vector<1x256xi32>
    %62 = arith.cmpi slt, %3, %61 : vector<1x256xi32>
    %63 = arith.andi %60, %62 : vector<1x256xi1>
    %64 = arith.extui %63 : vector<1x256xi1> to vector<1x256xi32>
    %65 = arith.sitofp %64 : vector<1x256xi32> to vector<1x256xf32>
    %c2_i32_19 = arith.constant 2 : i32
    %66 = vector.broadcast %c2_i32_19 : i32 to vector<1x256xi32>
    %67 = arith.cmpi sge, %3, %66 : vector<1x256xi32>
    %68 = arith.extui %67 : vector<1x256xi1> to vector<1x256xi32>
    %69 = arith.sitofp %68 : vector<1x256xi32> to vector<1x256xf32>
    %c14_i32_20 = arith.constant 14 : i32
    %70 = vector.broadcast %c14_i32_20 : i32 to vector<1x256xi32>
    %71 = arith.cmpi slt, %3, %70 : vector<1x256xi32>
    %72 = arith.extui %71 : vector<1x256xi1> to vector<1x256xi32>
    %73 = arith.sitofp %72 : vector<1x256xi32> to vector<1x256xf32>
    %c14_i32_21 = arith.constant 14 : i32
    %74 = vector.broadcast %c14_i32_21 : i32 to vector<1x256xi32>
    %75 = arith.cmpi slt, %2, %74 : vector<1x256xi32>
    %c2_i32_22 = arith.constant 2 : i32
    %76 = vector.broadcast %c2_i32_22 : i32 to vector<1x256xi32>
    %77 = arith.cmpi sge, %3, %76 : vector<1x256xi32>
    %78 = arith.andi %75, %77 : vector<1x256xi1>
    %79 = arith.extui %78 : vector<1x256xi1> to vector<1x256xi32>
    %80 = arith.sitofp %79 : vector<1x256xi32> to vector<1x256xf32>
    %c14_i32_23 = arith.constant 14 : i32
    %81 = vector.broadcast %c14_i32_23 : i32 to vector<1x256xi32>
    %82 = arith.cmpi slt, %2, %81 : vector<1x256xi32>
    %83 = arith.extui %82 : vector<1x256xi1> to vector<1x256xi32>
    %84 = arith.sitofp %83 : vector<1x256xi32> to vector<1x256xf32>
    %c14_i32_24 = arith.constant 14 : i32
    %85 = vector.broadcast %c14_i32_24 : i32 to vector<1x256xi32>
    %86 = arith.cmpi slt, %2, %85 : vector<1x256xi32>
    %c14_i32_25 = arith.constant 14 : i32
    %87 = vector.broadcast %c14_i32_25 : i32 to vector<1x256xi32>
    %88 = arith.cmpi slt, %3, %87 : vector<1x256xi32>
    %89 = arith.andi %86, %88 : vector<1x256xi1>
    %90 = arith.extui %89 : vector<1x256xi1> to vector<1x256xi32>
    %91 = arith.sitofp %90 : vector<1x256xi32> to vector<1x256xf32>
    %cst = arith.constant 0.000000e+00 : f32
    %92 = vector.broadcast %cst : f32 to vector<16x1xf32>
    %cst_26 = arith.constant 0.000000e+00 : f32
    %93 = vector.broadcast %cst_26 : f32 to vector<16x1xf32>
    %cst_27 = arith.constant 0.000000e+00 : f32
    %94 = vector.broadcast %cst_27 : f32 to vector<16x1xf32>
    %cst_28 = arith.constant 0.000000e+00 : f32
    %95 = vector.broadcast %cst_28 : f32 to vector<16x1xf32>
    %c0_29 = arith.constant 0 : index
    %c0_30 = arith.constant 0 : index
    %c0_31 = arith.constant 0 : index
    %96 = vector.load %arg1[%c0_29, %c0_30, %c0_31] : memref<2x16x256xf32, #tpu.memory_space<vmem>>, vector<1x16x256xf32>
    %97 = vector.shape_cast %96 : vector<1x16x256xf32> to vector<16x256xf32>
    %98 = vector.extract_strided_slice %0 {offsets = [0, 0], sizes = [16, 1], strides = [1, 1]} : vector<16x3xf32> to vector<16x1xf32>
    %99 = vector.broadcast %98 : vector<16x1xf32> to vector<16x256xf32>
    %100 = arith.mulf %97, %99 : vector<16x256xf32>
    %101 = vector.extract_strided_slice %0 {offsets = [0, 1], sizes = [16, 1], strides = [1, 1]} : vector<16x3xf32> to vector<16x1xf32>
    %102 = vector.broadcast %101 : vector<16x1xf32> to vector<16x256xf32>
    %103 = arith.addf %100, %102 : vector<16x256xf32>
    %cst_32 = arith.constant 0.000000e+00 : f32
    %104 = vector.broadcast %cst_32 : f32 to vector<16x256xf32>
    %105 = arith.cmpf ogt, %103, %104 : vector<16x256xf32>
    %106 = vector.extract_strided_slice %0 {offsets = [0, 2], sizes = [16, 1], strides = [1, 1]} : vector<16x3xf32> to vector<16x1xf32>
    %107 = vector.broadcast %106 : vector<16x1xf32> to vector<16x256xf32>
    %108 = arith.mulf %107, %103 : vector<16x256xf32>
    %109 = arith.select %105, %103, %108 : vector<16x256xi1>, vector<16x256xf32>
    %110 = vector.extract_strided_slice %1 {offsets = [0, 4], sizes = [16, 1], strides = [1, 1]} : vector<16x18xf32> to vector<16x1xf32>
    %111 = vector.broadcast %110 : vector<16x1xf32> to vector<16x256xf32>
    %112 = arith.mulf %109, %111 : vector<16x256xf32>
    %c17_i32 = arith.constant 17 : i32
    %113 = tpu.dynamic_rotate %109 by %c17_i32 dim 1 : vector<16x256xf32>, i32 -> vector<16x256xf32>
    %114 = vector.broadcast %10 : vector<1x256xf32> to vector<16x256xf32>
    %115 = arith.mulf %113, %114 : vector<16x256xf32>
    %116 = vector.extract_strided_slice %1 {offsets = [0, 0], sizes = [16, 1], strides = [1, 1]} : vector<16x18xf32> to vector<16x1xf32>
    %117 = vector.broadcast %116 : vector<16x1xf32> to vector<16x256xf32>
    %118 = arith.mulf %115, %117 : vector<16x256xf32>
    %119 = arith.addf %112, %118 : vector<16x256xf32>
    %c16_i32 = arith.constant 16 : i32
    %120 = tpu.dynamic_rotate %109 by %c16_i32 dim 1 : vector<16x256xf32>, i32 -> vector<16x256xf32>
    %121 = vector.broadcast %14 : vector<1x256xf32> to vector<16x256xf32>
    %122 = arith.mulf %120, %121 : vector<16x256xf32>
    %123 = vector.extract_strided_slice %1 {offsets = [0, 1], sizes = [16, 1], strides = [1, 1]} : vector<16x18xf32> to vector<16x1xf32>
    %124 = vector.broadcast %123 : vector<16x1xf32> to vector<16x256xf32>
    %125 = arith.mulf %122, %124 : vector<16x256xf32>
    %126 = arith.addf %119, %125 : vector<16x256xf32>
    %c15_i32_33 = arith.constant 15 : i32
    %127 = tpu.dynamic_rotate %109 by %c15_i32_33 dim 1 : vector<16x256xf32>, i32 -> vector<16x256xf32>
    %128 = vector.broadcast %21 : vector<1x256xf32> to vector<16x256xf32>
    %129 = arith.mulf %127, %128 : vector<16x256xf32>
    %130 = vector.extract_strided_slice %1 {offsets = [0, 2], sizes = [16, 1], strides = [1, 1]} : vector<16x18xf32> to vector<16x1xf32>
    %131 = vector.broadcast %130 : vector<16x1xf32> to vector<16x256xf32>
    %132 = arith.mulf %129, %131 : vector<16x256xf32>
    %133 = arith.addf %126, %132 : vector<16x256xf32>
    %c1_i32_34 = arith.constant 1 : i32
    %134 = tpu.dynamic_rotate %109 by %c1_i32_34 dim 1 : vector<16x256xf32>, i32 -> vector<16x256xf32>
    %135 = vector.broadcast %25 : vector<1x256xf32> to vector<16x256xf32>
    %136 = arith.mulf %134, %135 : vector<16x256xf32>
    %137 = vector.extract_strided_slice %1 {offsets = [0, 3], sizes = [16, 1], strides = [1, 1]} : vector<16x18xf32> to vector<16x1xf32>
    %138 = vector.broadcast %137 : vector<16x1xf32> to vector<16x256xf32>
    %139 = arith.mulf %136, %138 : vector<16x256xf32>
    %140 = arith.addf %133, %139 : vector<16x256xf32>
    %c255_i32 = arith.constant 255 : i32
    %141 = tpu.dynamic_rotate %109 by %c255_i32 dim 1 : vector<16x256xf32>, i32 -> vector<16x256xf32>
    %142 = vector.broadcast %29 : vector<1x256xf32> to vector<16x256xf32>
    %143 = arith.mulf %141, %142 : vector<16x256xf32>
    %144 = vector.extract_strided_slice %1 {offsets = [0, 5], sizes = [16, 1], strides = [1, 1]} : vector<16x18xf32> to vector<16x1xf32>
    %145 = vector.broadcast %144 : vector<16x1xf32> to vector<16x256xf32>
    %146 = arith.mulf %143, %145 : vector<16x256xf32>
    %147 = arith.addf %140, %146 : vector<16x256xf32>
    %c241_i32 = arith.constant 241 : i32
    %148 = tpu.dynamic_rotate %109 by %c241_i32 dim 1 : vector<16x256xf32>, i32 -> vector<16x256xf32>
    %149 = vector.broadcast %36 : vector<1x256xf32> to vector<16x256xf32>
    %150 = arith.mulf %148, %149 : vector<16x256xf32>
    %151 = vector.extract_strided_slice %1 {offsets = [0, 6], sizes = [16, 1], strides = [1, 1]} : vector<16x18xf32> to vector<16x1xf32>
    %152 = vector.broadcast %151 : vector<16x1xf32> to vector<16x256xf32>
    %153 = arith.mulf %150, %152 : vector<16x256xf32>
    %154 = arith.addf %147, %153 : vector<16x256xf32>
    %c240_i32 = arith.constant 240 : i32
    %155 = tpu.dynamic_rotate %109 by %c240_i32 dim 1 : vector<16x256xf32>, i32 -> vector<16x256xf32>
    %156 = vector.broadcast %40 : vector<1x256xf32> to vector<16x256xf32>
    %157 = arith.mulf %155, %156 : vector<16x256xf32>
    %158 = vector.extract_strided_slice %1 {offsets = [0, 7], sizes = [16, 1], strides = [1, 1]} : vector<16x18xf32> to vector<16x1xf32>
    %159 = vector.broadcast %158 : vector<16x1xf32> to vector<16x256xf32>
    %160 = arith.mulf %157, %159 : vector<16x256xf32>
    %161 = arith.addf %154, %160 : vector<16x256xf32>
    %c239_i32 = arith.constant 239 : i32
    %162 = tpu.dynamic_rotate %109 by %c239_i32 dim 1 : vector<16x256xf32>, i32 -> vector<16x256xf32>
    %163 = vector.broadcast %47 : vector<1x256xf32> to vector<16x256xf32>
    %164 = arith.mulf %162, %163 : vector<16x256xf32>
    %165 = vector.extract_strided_slice %1 {offsets = [0, 8], sizes = [16, 1], strides = [1, 1]} : vector<16x18xf32> to vector<16x1xf32>
    %166 = vector.broadcast %165 : vector<16x1xf32> to vector<16x256xf32>
    %167 = arith.mulf %164, %166 : vector<16x256xf32>
    %168 = arith.addf %161, %167 : vector<16x256xf32>
    %169 = vector.extract_strided_slice %1 {offsets = [0, 13], sizes = [16, 1], strides = [1, 1]} : vector<16x18xf32> to vector<16x1xf32>
    %170 = vector.broadcast %169 : vector<16x1xf32> to vector<16x256xf32>
    %171 = arith.mulf %109, %170 : vector<16x256xf32>
    %c34_i32 = arith.constant 34 : i32
    %172 = tpu.dynamic_rotate %109 by %c34_i32 dim 1 : vector<16x256xf32>, i32 -> vector<16x256xf32>
    %173 = vector.broadcast %54 : vector<1x256xf32> to vector<16x256xf32>
    %174 = arith.mulf %172, %173 : vector<16x256xf32>
    %175 = vector.extract_strided_slice %1 {offsets = [0, 9], sizes = [16, 1], strides = [1, 1]} : vector<16x18xf32> to vector<16x1xf32>
    %176 = vector.broadcast %175 : vector<16x1xf32> to vector<16x256xf32>
    %177 = arith.mulf %174, %176 : vector<16x256xf32>
    %178 = arith.addf %171, %177 : vector<16x256xf32>
    %c32_i32 = arith.constant 32 : i32
    %179 = tpu.dynamic_rotate %109 by %c32_i32 dim 1 : vector<16x256xf32>, i32 -> vector<16x256xf32>
    %180 = vector.broadcast %58 : vector<1x256xf32> to vector<16x256xf32>
    %181 = arith.mulf %179, %180 : vector<16x256xf32>
    %182 = vector.extract_strided_slice %1 {offsets = [0, 10], sizes = [16, 1], strides = [1, 1]} : vector<16x18xf32> to vector<16x1xf32>
    %183 = vector.broadcast %182 : vector<16x1xf32> to vector<16x256xf32>
    %184 = arith.mulf %181, %183 : vector<16x256xf32>
    %185 = arith.addf %178, %184 : vector<16x256xf32>
    %c30_i32 = arith.constant 30 : i32
    %186 = tpu.dynamic_rotate %109 by %c30_i32 dim 1 : vector<16x256xf32>, i32 -> vector<16x256xf32>
    %187 = vector.broadcast %65 : vector<1x256xf32> to vector<16x256xf32>
    %188 = arith.mulf %186, %187 : vector<16x256xf32>
    %189 = vector.extract_strided_slice %1 {offsets = [0, 11], sizes = [16, 1], strides = [1, 1]} : vector<16x18xf32> to vector<16x1xf32>
    %190 = vector.broadcast %189 : vector<16x1xf32> to vector<16x256xf32>
    %191 = arith.mulf %188, %190 : vector<16x256xf32>
    %192 = arith.addf %185, %191 : vector<16x256xf32>
    %c2_i32_35 = arith.constant 2 : i32
    %193 = tpu.dynamic_rotate %109 by %c2_i32_35 dim 1 : vector<16x256xf32>, i32 -> vector<16x256xf32>
    %194 = vector.broadcast %69 : vector<1x256xf32> to vector<16x256xf32>
    %195 = arith.mulf %193, %194 : vector<16x256xf32>
    %196 = vector.extract_strided_slice %1 {offsets = [0, 12], sizes = [16, 1], strides = [1, 1]} : vector<16x18xf32> to vector<16x1xf32>
    %197 = vector.broadcast %196 : vector<16x1xf32> to vector<16x256xf32>
    %198 = arith.mulf %195, %197 : vector<16x256xf32>
    %199 = arith.addf %192, %198 : vector<16x256xf32>
    %c254_i32 = arith.constant 254 : i32
    %200 = tpu.dynamic_rotate %109 by %c254_i32 dim 1 : vector<16x256xf32>, i32 -> vector<16x256xf32>
    %201 = vector.broadcast %73 : vector<1x256xf32> to vector<16x256xf32>
    %202 = arith.mulf %200, %201 : vector<16x256xf32>
    %203 = vector.extract_strided_slice %1 {offsets = [0, 14], sizes = [16, 1], strides = [1, 1]} : vector<16x18xf32> to vector<16x1xf32>
    %204 = vector.broadcast %203 : vector<16x1xf32> to vector<16x256xf32>
    %205 = arith.mulf %202, %204 : vector<16x256xf32>
    %206 = arith.addf %199, %205 : vector<16x256xf32>
    %c226_i32 = arith.constant 226 : i32
    %207 = tpu.dynamic_rotate %109 by %c226_i32 dim 1 : vector<16x256xf32>, i32 -> vector<16x256xf32>
    %208 = vector.broadcast %80 : vector<1x256xf32> to vector<16x256xf32>
    %209 = arith.mulf %207, %208 : vector<16x256xf32>
    %210 = vector.extract_strided_slice %1 {offsets = [0, 15], sizes = [16, 1], strides = [1, 1]} : vector<16x18xf32> to vector<16x1xf32>
    %211 = vector.broadcast %210 : vector<16x1xf32> to vector<16x256xf32>
    %212 = arith.mulf %209, %211 : vector<16x256xf32>
    %213 = arith.addf %206, %212 : vector<16x256xf32>
    %c224_i32 = arith.constant 224 : i32
    %214 = tpu.dynamic_rotate %109 by %c224_i32 dim 1 : vector<16x256xf32>, i32 -> vector<16x256xf32>
    %215 = vector.broadcast %84 : vector<1x256xf32> to vector<16x256xf32>
    %216 = arith.mulf %214, %215 : vector<16x256xf32>
    %217 = vector.extract_strided_slice %1 {offsets = [0, 16], sizes = [16, 1], strides = [1, 1]} : vector<16x18xf32> to vector<16x1xf32>
    %218 = vector.broadcast %217 : vector<16x1xf32> to vector<16x256xf32>
    %219 = arith.mulf %216, %218 : vector<16x256xf32>
    %220 = arith.addf %213, %219 : vector<16x256xf32>
    %c222_i32 = arith.constant 222 : i32
    %221 = tpu.dynamic_rotate %109 by %c222_i32 dim 1 : vector<16x256xf32>, i32 -> vector<16x256xf32>
    %222 = vector.broadcast %91 : vector<1x256xf32> to vector<16x256xf32>
    %223 = arith.mulf %221, %222 : vector<16x256xf32>
    %224 = vector.extract_strided_slice %1 {offsets = [0, 17], sizes = [16, 1], strides = [1, 1]} : vector<16x18xf32> to vector<16x1xf32>
    %225 = vector.broadcast %224 : vector<16x1xf32> to vector<16x256xf32>
    %226 = arith.mulf %223, %225 : vector<16x256xf32>
    %227 = arith.addf %220, %226 : vector<16x256xf32>
    %c0_36 = arith.constant 0 : index
    %c0_37 = arith.constant 0 : index
    %c0_38 = arith.constant 0 : index
    %228 = vector.load %arg5[%c0_36, %c0_37, %c0_38] : memref<2x32x256xf32, #tpu.memory_space<vmem>>, vector<1x16x256xf32>
    %229 = vector.shape_cast %228 : vector<1x16x256xf32> to vector<16x256xf32>
    %230 = vector.shape_cast %168 : vector<16x256xf32> to vector<1x16x256xf32>
    tpu.vector_store %arg5[%c0_36, %c0_37, %c0_38], %230 {strides = array<i32>} : memref<2x32x256xf32, #tpu.memory_space<vmem>>, vector<1x16x256xf32>,
    %c0_39 = arith.constant 0 : index
    %c16 = arith.constant 16 : index
    %c0_40 = arith.constant 0 : index
    %231 = vector.load %arg5[%c0_39, %c16, %c0_40] : memref<2x32x256xf32, #tpu.memory_space<vmem>>, vector<1x16x256xf32>
    %232 = vector.shape_cast %231 : vector<1x16x256xf32> to vector<16x256xf32>
    %233 = vector.shape_cast %227 : vector<16x256xf32> to vector<1x16x256xf32>
    tpu.vector_store %arg5[%c0_39, %c16, %c0_40], %233 {strides = array<i32>} : memref<2x32x256xf32, #tpu.memory_space<vmem>>, vector<1x16x256xf32>,
    %cst_41 = arith.constant dense<0.000000e+00> : vector<16xf32>
    %234 = vector.multi_reduction <add>, %168, %cst_41 [1] : vector<16x256xf32> to vector<16xf32>
    %235 = vector.shape_cast %234 : vector<16xf32> to vector<16x1xf32>
    %236 = arith.addf %92, %235 : vector<16x1xf32>
    %237 = arith.mulf %168, %168 : vector<16x256xf32>
    %cst_42 = arith.constant dense<0.000000e+00> : vector<16xf32>
    %238 = vector.multi_reduction <add>, %237, %cst_42 [1] : vector<16x256xf32> to vector<16xf32>
    %239 = vector.shape_cast %238 : vector<16xf32> to vector<16x1xf32>
    %240 = arith.addf %93, %239 : vector<16x1xf32>
    %cst_43 = arith.constant dense<0.000000e+00> : vector<16xf32>
    %241 = vector.multi_reduction <add>, %227, %cst_43 [1] : vector<16x256xf32> to vector<16xf32>
    %242 = vector.shape_cast %241 : vector<16xf32> to vector<16x1xf32>
    %243 = arith.addf %94, %242 : vector<16x1xf32>
    %244 = arith.mulf %227, %227 : vector<16x256xf32>
    %cst_44 = arith.constant dense<0.000000e+00> : vector<16xf32>
    %245 = vector.multi_reduction <add>, %244, %cst_44 [1] : vector<16x256xf32> to vector<16xf32>
    %246 = vector.shape_cast %245 : vector<16xf32> to vector<16x1xf32>
    %247 = arith.addf %95, %246 : vector<16x1xf32>
    %c1_45 = arith.constant 1 : index
    %c0_46 = arith.constant 0 : index
    %c0_47 = arith.constant 0 : index
    %248 = vector.load %arg1[%c1_45, %c0_46, %c0_47] : memref<2x16x256xf32, #tpu.memory_space<vmem>>, vector<1x16x256xf32>
    %249 = vector.shape_cast %248 : vector<1x16x256xf32> to vector<16x256xf32>
    %250 = vector.extract_strided_slice %0 {offsets = [0, 0], sizes = [16, 1], strides = [1, 1]} : vector<16x3xf32> to vector<16x1xf32>
    %251 = vector.broadcast %250 : vector<16x1xf32> to vector<16x256xf32>
    %252 = arith.mulf %249, %251 : vector<16x256xf32>
    %253 = vector.extract_strided_slice %0 {offsets = [0, 1], sizes = [16, 1], strides = [1, 1]} : vector<16x3xf32> to vector<16x1xf32>
    %254 = vector.broadcast %253 : vector<16x1xf32> to vector<16x256xf32>
    %255 = arith.addf %252, %254 : vector<16x256xf32>
    %cst_48 = arith.constant 0.000000e+00 : f32
    %256 = vector.broadcast %cst_48 : f32 to vector<16x256xf32>
    %257 = arith.cmpf ogt, %255, %256 : vector<16x256xf32>
    %258 = vector.extract_strided_slice %0 {offsets = [0, 2], sizes = [16, 1], strides = [1, 1]} : vector<16x3xf32> to vector<16x1xf32>
    %259 = vector.broadcast %258 : vector<16x1xf32> to vector<16x256xf32>
    %260 = arith.mulf %259, %255 : vector<16x256xf32>
    %261 = arith.select %257, %255, %260 : vector<16x256xi1>, vector<16x256xf32>
    %262 = vector.extract_strided_slice %1 {offsets = [0, 4], sizes = [16, 1], strides = [1, 1]} : vector<16x18xf32> to vector<16x1xf32>
    %263 = vector.broadcast %262 : vector<16x1xf32> to vector<16x256xf32>
    %264 = arith.mulf %261, %263 : vector<16x256xf32>
    %c17_i32_49 = arith.constant 17 : i32
    %265 = tpu.dynamic_rotate %261 by %c17_i32_49 dim 1 : vector<16x256xf32>, i32 -> vector<16x256xf32>
    %266 = vector.broadcast %10 : vector<1x256xf32> to vector<16x256xf32>
    %267 = arith.mulf %265, %266 : vector<16x256xf32>
    %268 = vector.extract_strided_slice %1 {offsets = [0, 0], sizes = [16, 1], strides = [1, 1]} : vector<16x18xf32> to vector<16x1xf32>
    %269 = vector.broadcast %268 : vector<16x1xf32> to vector<16x256xf32>
    %270 = arith.mulf %267, %269 : vector<16x256xf32>
    %271 = arith.addf %264, %270 : vector<16x256xf32>
    %c16_i32_50 = arith.constant 16 : i32
    %272 = tpu.dynamic_rotate %261 by %c16_i32_50 dim 1 : vector<16x256xf32>, i32 -> vector<16x256xf32>
    %273 = vector.broadcast %14 : vector<1x256xf32> to vector<16x256xf32>
    %274 = arith.mulf %272, %273 : vector<16x256xf32>
    %275 = vector.extract_strided_slice %1 {offsets = [0, 1], sizes = [16, 1], strides = [1, 1]} : vector<16x18xf32> to vector<16x1xf32>
    %276 = vector.broadcast %275 : vector<16x1xf32> to vector<16x256xf32>
    %277 = arith.mulf %274, %276 : vector<16x256xf32>
    %278 = arith.addf %271, %277 : vector<16x256xf32>
    %c15_i32_51 = arith.constant 15 : i32
    %279 = tpu.dynamic_rotate %261 by %c15_i32_51 dim 1 : vector<16x256xf32>, i32 -> vector<16x256xf32>
    %280 = vector.broadcast %21 : vector<1x256xf32> to vector<16x256xf32>
    %281 = arith.mulf %279, %280 : vector<16x256xf32>
    %282 = vector.extract_strided_slice %1 {offsets = [0, 2], sizes = [16, 1], strides = [1, 1]} : vector<16x18xf32> to vector<16x1xf32>
    %283 = vector.broadcast %282 : vector<16x1xf32> to vector<16x256xf32>
    %284 = arith.mulf %281, %283 : vector<16x256xf32>
    %285 = arith.addf %278, %284 : vector<16x256xf32>
    %c1_i32_52 = arith.constant 1 : i32
    %286 = tpu.dynamic_rotate %261 by %c1_i32_52 dim 1 : vector<16x256xf32>, i32 -> vector<16x256xf32>
    %287 = vector.broadcast %25 : vector<1x256xf32> to vector<16x256xf32>
    %288 = arith.mulf %286, %287 : vector<16x256xf32>
    %289 = vector.extract_strided_slice %1 {offsets = [0, 3], sizes = [16, 1], strides = [1, 1]} : vector<16x18xf32> to vector<16x1xf32>
    %290 = vector.broadcast %289 : vector<16x1xf32> to vector<16x256xf32>
    %291 = arith.mulf %288, %290 : vector<16x256xf32>
    %292 = arith.addf %285, %291 : vector<16x256xf32>
    %c255_i32_53 = arith.constant 255 : i32
    %293 = tpu.dynamic_rotate %261 by %c255_i32_53 dim 1 : vector<16x256xf32>, i32 -> vector<16x256xf32>
    %294 = vector.broadcast %29 : vector<1x256xf32> to vector<16x256xf32>
    %295 = arith.mulf %293, %294 : vector<16x256xf32>
    %296 = vector.extract_strided_slice %1 {offsets = [0, 5], sizes = [16, 1], strides = [1, 1]} : vector<16x18xf32> to vector<16x1xf32>
    %297 = vector.broadcast %296 : vector<16x1xf32> to vector<16x256xf32>
    %298 = arith.mulf %295, %297 : vector<16x256xf32>
    %299 = arith.addf %292, %298 : vector<16x256xf32>
    %c241_i32_54 = arith.constant 241 : i32
    %300 = tpu.dynamic_rotate %261 by %c241_i32_54 dim 1 : vector<16x256xf32>, i32 -> vector<16x256xf32>
    %301 = vector.broadcast %36 : vector<1x256xf32> to vector<16x256xf32>
    %302 = arith.mulf %300, %301 : vector<16x256xf32>
    %303 = vector.extract_strided_slice %1 {offsets = [0, 6], sizes = [16, 1], strides = [1, 1]} : vector<16x18xf32> to vector<16x1xf32>
    %304 = vector.broadcast %303 : vector<16x1xf32> to vector<16x256xf32>
    %305 = arith.mulf %302, %304 : vector<16x256xf32>
    %306 = arith.addf %299, %305 : vector<16x256xf32>
    %c240_i32_55 = arith.constant 240 : i32
    %307 = tpu.dynamic_rotate %261 by %c240_i32_55 dim 1 : vector<16x256xf32>, i32 -> vector<16x256xf32>
    %308 = vector.broadcast %40 : vector<1x256xf32> to vector<16x256xf32>
    %309 = arith.mulf %307, %308 : vector<16x256xf32>
    %310 = vector.extract_strided_slice %1 {offsets = [0, 7], sizes = [16, 1], strides = [1, 1]} : vector<16x18xf32> to vector<16x1xf32>
    %311 = vector.broadcast %310 : vector<16x1xf32> to vector<16x256xf32>
    %312 = arith.mulf %309, %311 : vector<16x256xf32>
    %313 = arith.addf %306, %312 : vector<16x256xf32>
    %c239_i32_56 = arith.constant 239 : i32
    %314 = tpu.dynamic_rotate %261 by %c239_i32_56 dim 1 : vector<16x256xf32>, i32 -> vector<16x256xf32>
    %315 = vector.broadcast %47 : vector<1x256xf32> to vector<16x256xf32>
    %316 = arith.mulf %314, %315 : vector<16x256xf32>
    %317 = vector.extract_strided_slice %1 {offsets = [0, 8], sizes = [16, 1], strides = [1, 1]} : vector<16x18xf32> to vector<16x1xf32>
    %318 = vector.broadcast %317 : vector<16x1xf32> to vector<16x256xf32>
    %319 = arith.mulf %316, %318 : vector<16x256xf32>
    %320 = arith.addf %313, %319 : vector<16x256xf32>
    %321 = vector.extract_strided_slice %1 {offsets = [0, 13], sizes = [16, 1], strides = [1, 1]} : vector<16x18xf32> to vector<16x1xf32>
    %322 = vector.broadcast %321 : vector<16x1xf32> to vector<16x256xf32>
    %323 = arith.mulf %261, %322 : vector<16x256xf32>
    %c34_i32_57 = arith.constant 34 : i32
    %324 = tpu.dynamic_rotate %261 by %c34_i32_57 dim 1 : vector<16x256xf32>, i32 -> vector<16x256xf32>
    %325 = vector.broadcast %54 : vector<1x256xf32> to vector<16x256xf32>
    %326 = arith.mulf %324, %325 : vector<16x256xf32>
    %327 = vector.extract_strided_slice %1 {offsets = [0, 9], sizes = [16, 1], strides = [1, 1]} : vector<16x18xf32> to vector<16x1xf32>
    %328 = vector.broadcast %327 : vector<16x1xf32> to vector<16x256xf32>
    %329 = arith.mulf %326, %328 : vector<16x256xf32>
    %330 = arith.addf %323, %329 : vector<16x256xf32>
    %c32_i32_58 = arith.constant 32 : i32
    %331 = tpu.dynamic_rotate %261 by %c32_i32_58 dim 1 : vector<16x256xf32>, i32 -> vector<16x256xf32>
    %332 = vector.broadcast %58 : vector<1x256xf32> to vector<16x256xf32>
    %333 = arith.mulf %331, %332 : vector<16x256xf32>
    %334 = vector.extract_strided_slice %1 {offsets = [0, 10], sizes = [16, 1], strides = [1, 1]} : vector<16x18xf32> to vector<16x1xf32>
    %335 = vector.broadcast %334 : vector<16x1xf32> to vector<16x256xf32>
    %336 = arith.mulf %333, %335 : vector<16x256xf32>
    %337 = arith.addf %330, %336 : vector<16x256xf32>
    %c30_i32_59 = arith.constant 30 : i32
    %338 = tpu.dynamic_rotate %261 by %c30_i32_59 dim 1 : vector<16x256xf32>, i32 -> vector<16x256xf32>
    %339 = vector.broadcast %65 : vector<1x256xf32> to vector<16x256xf32>
    %340 = arith.mulf %338, %339 : vector<16x256xf32>
    %341 = vector.extract_strided_slice %1 {offsets = [0, 11], sizes = [16, 1], strides = [1, 1]} : vector<16x18xf32> to vector<16x1xf32>
    %342 = vector.broadcast %341 : vector<16x1xf32> to vector<16x256xf32>
    %343 = arith.mulf %340, %342 : vector<16x256xf32>
    %344 = arith.addf %337, %343 : vector<16x256xf32>
    %c2_i32_60 = arith.constant 2 : i32
    %345 = tpu.dynamic_rotate %261 by %c2_i32_60 dim 1 : vector<16x256xf32>, i32 -> vector<16x256xf32>
    %346 = vector.broadcast %69 : vector<1x256xf32> to vector<16x256xf32>
    %347 = arith.mulf %345, %346 : vector<16x256xf32>
    %348 = vector.extract_strided_slice %1 {offsets = [0, 12], sizes = [16, 1], strides = [1, 1]} : vector<16x18xf32> to vector<16x1xf32>
    %349 = vector.broadcast %348 : vector<16x1xf32> to vector<16x256xf32>
    %350 = arith.mulf %347, %349 : vector<16x256xf32>
    %351 = arith.addf %344, %350 : vector<16x256xf32>
    %c254_i32_61 = arith.constant 254 : i32
    %352 = tpu.dynamic_rotate %261 by %c254_i32_61 dim 1 : vector<16x256xf32>, i32 -> vector<16x256xf32>
    %353 = vector.broadcast %73 : vector<1x256xf32> to vector<16x256xf32>
    %354 = arith.mulf %352, %353 : vector<16x256xf32>
    %355 = vector.extract_strided_slice %1 {offsets = [0, 14], sizes = [16, 1], strides = [1, 1]} : vector<16x18xf32> to vector<16x1xf32>
    %356 = vector.broadcast %355 : vector<16x1xf32> to vector<16x256xf32>
    %357 = arith.mulf %354, %356 : vector<16x256xf32>
    %358 = arith.addf %351, %357 : vector<16x256xf32>
    %c226_i32_62 = arith.constant 226 : i32
    %359 = tpu.dynamic_rotate %261 by %c226_i32_62 dim 1 : vector<16x256xf32>, i32 -> vector<16x256xf32>
    %360 = vector.broadcast %80 : vector<1x256xf32> to vector<16x256xf32>
    %361 = arith.mulf %359, %360 : vector<16x256xf32>
    %362 = vector.extract_strided_slice %1 {offsets = [0, 15], sizes = [16, 1], strides = [1, 1]} : vector<16x18xf32> to vector<16x1xf32>
    %363 = vector.broadcast %362 : vector<16x1xf32> to vector<16x256xf32>
    %364 = arith.mulf %361, %363 : vector<16x256xf32>
    %365 = arith.addf %358, %364 : vector<16x256xf32>
    %c224_i32_63 = arith.constant 224 : i32
    %366 = tpu.dynamic_rotate %261 by %c224_i32_63 dim 1 : vector<16x256xf32>, i32 -> vector<16x256xf32>
    %367 = vector.broadcast %84 : vector<1x256xf32> to vector<16x256xf32>
    %368 = arith.mulf %366, %367 : vector<16x256xf32>
    %369 = vector.extract_strided_slice %1 {offsets = [0, 16], sizes = [16, 1], strides = [1, 1]} : vector<16x18xf32> to vector<16x1xf32>
    %370 = vector.broadcast %369 : vector<16x1xf32> to vector<16x256xf32>
    %371 = arith.mulf %368, %370 : vector<16x256xf32>
    %372 = arith.addf %365, %371 : vector<16x256xf32>
    %c222_i32_64 = arith.constant 222 : i32
    %373 = tpu.dynamic_rotate %261 by %c222_i32_64 dim 1 : vector<16x256xf32>, i32 -> vector<16x256xf32>
    %374 = vector.broadcast %91 : vector<1x256xf32> to vector<16x256xf32>
    %375 = arith.mulf %373, %374 : vector<16x256xf32>
    %376 = vector.extract_strided_slice %1 {offsets = [0, 17], sizes = [16, 1], strides = [1, 1]} : vector<16x18xf32> to vector<16x1xf32>
    %377 = vector.broadcast %376 : vector<16x1xf32> to vector<16x256xf32>
    %378 = arith.mulf %375, %377 : vector<16x256xf32>
    %379 = arith.addf %372, %378 : vector<16x256xf32>
    %c1_65 = arith.constant 1 : index
    %c0_66 = arith.constant 0 : index
    %c0_67 = arith.constant 0 : index
    %380 = vector.load %arg5[%c1_65, %c0_66, %c0_67] : memref<2x32x256xf32, #tpu.memory_space<vmem>>, vector<1x16x256xf32>
    %381 = vector.shape_cast %380 : vector<1x16x256xf32> to vector<16x256xf32>
    %382 = vector.shape_cast %320 : vector<16x256xf32> to vector<1x16x256xf32>
    tpu.vector_store %arg5[%c1_65, %c0_66, %c0_67], %382 {strides = array<i32>} : memref<2x32x256xf32, #tpu.memory_space<vmem>>, vector<1x16x256xf32>,
    %c1_68 = arith.constant 1 : index
    %c16_69 = arith.constant 16 : index
    %c0_70 = arith.constant 0 : index
    %383 = vector.load %arg5[%c1_68, %c16_69, %c0_70] : memref<2x32x256xf32, #tpu.memory_space<vmem>>, vector<1x16x256xf32>
    %384 = vector.shape_cast %383 : vector<1x16x256xf32> to vector<16x256xf32>
    %385 = vector.shape_cast %379 : vector<16x256xf32> to vector<1x16x256xf32>
    tpu.vector_store %arg5[%c1_68, %c16_69, %c0_70], %385 {strides = array<i32>} : memref<2x32x256xf32, #tpu.memory_space<vmem>>, vector<1x16x256xf32>,
    %cst_71 = arith.constant dense<0.000000e+00> : vector<16xf32>
    %386 = vector.multi_reduction <add>, %320, %cst_71 [1] : vector<16x256xf32> to vector<16xf32>
    %387 = vector.shape_cast %386 : vector<16xf32> to vector<16x1xf32>
    %388 = arith.addf %236, %387 : vector<16x1xf32>
    %389 = arith.mulf %320, %320 : vector<16x256xf32>
    %cst_72 = arith.constant dense<0.000000e+00> : vector<16xf32>
    %390 = vector.multi_reduction <add>, %389, %cst_72 [1] : vector<16x256xf32> to vector<16xf32>
    %391 = vector.shape_cast %390 : vector<16xf32> to vector<16x1xf32>
    %392 = arith.addf %240, %391 : vector<16x1xf32>
    %cst_73 = arith.constant dense<0.000000e+00> : vector<16xf32>
    %393 = vector.multi_reduction <add>, %379, %cst_73 [1] : vector<16x256xf32> to vector<16xf32>
    %394 = vector.shape_cast %393 : vector<16xf32> to vector<16x1xf32>
    %395 = arith.addf %243, %394 : vector<16x1xf32>
    %396 = arith.mulf %379, %379 : vector<16x256xf32>
    %cst_74 = arith.constant dense<0.000000e+00> : vector<16xf32>
    %397 = vector.multi_reduction <add>, %396, %cst_74 [1] : vector<16x256xf32> to vector<16xf32>
    %398 = vector.shape_cast %397 : vector<16xf32> to vector<16x1xf32>
    %399 = arith.addf %247, %398 : vector<16x1xf32>
    %400 = tpu.concatenate %388, %392, %395, %399 in 1 : vector<16x1xf32>, vector<16x1xf32>, vector<16x1xf32>, vector<16x1xf32> -> vector<16x4xf32>
    %c0_75 = arith.constant 0 : index
    %c0_76 = arith.constant 0 : index
    %c0_77 = arith.constant 0 : index
    %401 = vector.load %arg6[%c0_75, %c0_76, %c0_77] : memref<1x16x4xf32, #tpu.memory_space<vmem>>, vector<1x16x4xf32>
    %402 = vector.shape_cast %401 : vector<1x16x4xf32> to vector<16x4xf32>
    %403 = vector.shape_cast %400 : vector<16x4xf32> to vector<1x16x4xf32>
    tpu.vector_store %arg6[%c0_75, %c0_76, %c0_77], %403 {strides = array<i32>} : memref<1x16x4xf32, #tpu.memory_space<vmem>>, vector<1x16x4xf32>,
    return
  }
  func.func @transform_0(%arg0: i32) -> (i32, i32, i32) {
    %c0_i32 = arith.constant 0 : i32
    %c0_i32_0 = arith.constant 0 : i32
    %c0_i32_1 = arith.constant 0 : i32
    return %arg0, %c0_i32, %c0_i32_0 : i32, i32, i32
  }
  func.func @transform_1(%arg0: i32) -> (i32, i32) {
    %c0_i32 = arith.constant 0 : i32
    %c0_i32_0 = arith.constant 0 : i32
    %c0_i32_1 = arith.constant 0 : i32
    return %c0_i32, %c0_i32_0 : i32, i32
  }
  func.func @transform_2(%arg0: i32) -> (i32, i32) {
    %c0_i32 = arith.constant 0 : i32
    %c0_i32_0 = arith.constant 0 : i32
    %c0_i32_1 = arith.constant 0 : i32
    return %c0_i32, %c0_i32_0 : i32, i32
  }
  func.func @transform_3(%arg0: i32) -> (i32, i32) {
    %c0_i32 = arith.constant 0 : i32
    %c0_i32_0 = arith.constant 0 : i32
    %c0_i32_1 = arith.constant 0 : i32
    return %c0_i32, %c0_i32_0 : i32, i32
  }
  func.func @transform_4(%arg0: i32) -> (i32, i32, i32) {
    %c0_i32 = arith.constant 0 : i32
    %c0_i32_0 = arith.constant 0 : i32
    %c0_i32_1 = arith.constant 0 : i32
    return %arg0, %c0_i32, %c0_i32_0 : i32, i32, i32
  }
  func.func @transform_5(%arg0: i32) -> (i32, i32, i32) {
    %c0_i32 = arith.constant 0 : i32
    %c0_i32_0 = arith.constant 0 : i32
    %c0_i32_1 = arith.constant 0 : i32
    return %arg0, %c0_i32, %c0_i32_0 : i32, i32, i32
  }
}

module attributes {stable_mosaic.version = 11 : i64} {
  func.func @kernel_c(%arg0: i32, %arg1: memref<2x32x256xf32, #tpu.memory_space<vmem>>, %arg2: memref<2x32x256xf32, #tpu.memory_space<vmem>>, %arg3: memref<32x3xf32, #tpu.memory_space<vmem>>, %arg4: memref<2x32xf32, #tpu.memory_space<vmem>>, %arg5: memref<2x1xf32, #tpu.memory_space<vmem>>, %arg6: memref<32x2xf32, #tpu.memory_space<vmem>>, %arg7: memref<32x1xf32, #tpu.memory_space<vmem>>, %arg8: memref<2x32x256xf32, #tpu.memory_space<vmem>>) attributes {dimension_semantics = [#tpu.dimension_semantics<parallel>], iteration_bounds = array<i64: 1>, scalar_prefetch = 0 : i64, scratch_operands = 0 : i64, tpu.core_type = #tpu.core_type<tc>, window_params = [{transform_indices = @transform_0, window_bounds = array<i64: 2, 32, 256>}, {transform_indices = @transform_1, window_bounds = array<i64: 2, 32, 256>}, {pipeline_mode = #tpu.pipeline_mode<synchronous>, transform_indices = @transform_2, window_bounds = array<i64: 32, 3>}, {pipeline_mode = #tpu.pipeline_mode<synchronous>, transform_indices = @transform_3, window_bounds = array<i64: 2, 32>}, {pipeline_mode = #tpu.pipeline_mode<synchronous>, transform_indices = @transform_4, window_bounds = array<i64: 2, 1>}, {pipeline_mode = #tpu.pipeline_mode<synchronous>, transform_indices = @transform_5, window_bounds = array<i64: 32, 2>}, {pipeline_mode = #tpu.pipeline_mode<synchronous>, transform_indices = @transform_6, window_bounds = array<i64: 32, 1>}, {transform_indices = @transform_7, window_bounds = array<i64: 2, 32, 256>}]} {
    %c0 = arith.constant 0 : index
    %c0_0 = arith.constant 0 : index
    %0 = vector.load %arg3[%c0, %c0_0] : memref<32x3xf32, #tpu.memory_space<vmem>>, vector<32x3xf32>
    %1 = vector.extract_strided_slice %0 {offsets = [0, 0], sizes = [32, 1], strides = [1, 1]} : vector<32x3xf32> to vector<32x1xf32>
    %2 = vector.extract_strided_slice %0 {offsets = [0, 1], sizes = [32, 1], strides = [1, 1]} : vector<32x3xf32> to vector<32x1xf32>
    %3 = vector.extract_strided_slice %0 {offsets = [0, 2], sizes = [32, 1], strides = [1, 1]} : vector<32x3xf32> to vector<32x1xf32>
    %c0_1 = arith.constant 0 : index
    %c0_2 = arith.constant 0 : index
    %c0_3 = arith.constant 0 : index
    %4 = vector.load %arg1[%c0_1, %c0_2, %c0_3] : memref<2x32x256xf32, #tpu.memory_space<vmem>>, vector<1x32x256xf32>
    %5 = vector.shape_cast %4 : vector<1x32x256xf32> to vector<32x256xf32>
    %6 = vector.broadcast %1 : vector<32x1xf32> to vector<32x256xf32>
    %7 = arith.mulf %5, %6 : vector<32x256xf32>
    %8 = vector.broadcast %2 : vector<32x1xf32> to vector<32x256xf32>
    %9 = arith.addf %7, %8 : vector<32x256xf32>
    %cst = arith.constant 0.000000e+00 : f32
    %10 = vector.broadcast %cst : f32 to vector<32x256xf32>
    %11 = arith.cmpf ogt, %9, %10 : vector<32x256xf32>
    %12 = vector.broadcast %3 : vector<32x1xf32> to vector<32x256xf32>
    %13 = arith.mulf %12, %9 : vector<32x256xf32>
    %14 = arith.select %11, %9, %13 : vector<32x256xi1>, vector<32x256xf32>
    %cst_4 = arith.constant dense<0.000000e+00> : vector<32xf32>
    %15 = vector.multi_reduction <add>, %14, %cst_4 [1] : vector<32x256xf32> to vector<32xf32>
    %16 = vector.shape_cast %15 : vector<32xf32> to vector<32x1xf32>
    %cst_5 = arith.constant 3.906250e-03 : f32
    %17 = vector.broadcast %cst_5 : f32 to vector<32x1xf32>
    %18 = arith.mulf %16, %17 : vector<32x1xf32>
    %c1 = arith.constant 1 : index
    %c0_6 = arith.constant 0 : index
    %c0_7 = arith.constant 0 : index
    %19 = vector.load %arg1[%c1, %c0_6, %c0_7] : memref<2x32x256xf32, #tpu.memory_space<vmem>>, vector<1x32x256xf32>
    %20 = vector.shape_cast %19 : vector<1x32x256xf32> to vector<32x256xf32>
    %21 = vector.broadcast %1 : vector<32x1xf32> to vector<32x256xf32>
    %22 = arith.mulf %20, %21 : vector<32x256xf32>
    %23 = vector.broadcast %2 : vector<32x1xf32> to vector<32x256xf32>
    %24 = arith.addf %22, %23 : vector<32x256xf32>
    %cst_8 = arith.constant 0.000000e+00 : f32
    %25 = vector.broadcast %cst_8 : f32 to vector<32x256xf32>
    %26 = arith.cmpf ogt, %24, %25 : vector<32x256xf32>
    %27 = vector.broadcast %3 : vector<32x1xf32> to vector<32x256xf32>
    %28 = arith.mulf %27, %24 : vector<32x256xf32>
    %29 = arith.select %26, %24, %28 : vector<32x256xi1>, vector<32x256xf32>
    %cst_9 = arith.constant dense<0.000000e+00> : vector<32xf32>
    %30 = vector.multi_reduction <add>, %29, %cst_9 [1] : vector<32x256xf32> to vector<32xf32>
    %31 = vector.shape_cast %30 : vector<32xf32> to vector<32x1xf32>
    %cst_10 = arith.constant 3.906250e-03 : f32
    %32 = vector.broadcast %cst_10 : f32 to vector<32x1xf32>
    %33 = arith.mulf %31, %32 : vector<32x1xf32>
    %34 = tpu.concatenate %18, %33 in 1 : vector<32x1xf32>, vector<32x1xf32> -> vector<32x2xf32>
    %c0_11 = arith.constant 0 : index
    %c0_12 = arith.constant 0 : index
    %35 = vector.load %arg4[%c0_11, %c0_12] : memref<2x32xf32, #tpu.memory_space<vmem>>, vector<2x32xf32>
    %cst_13 = arith.constant dense<0.000000e+00> : vector<2x2xf32>
    %36 = tpu.matmul %35, %34, %cst_13 {dimension_numbers = #tpu.dot_dimension_numbers<[1], [0], [0], [1], [0, 0, 1, 1], [], []>} : vector<2x32xf32>, vector<32x2xf32>, vector<2x2xf32> -> vector<2x2xf32>
    %c0_14 = arith.constant 0 : index
    %c0_15 = arith.constant 0 : index
    %37 = vector.load %arg5[%c0_14, %c0_15] : memref<2x1xf32, #tpu.memory_space<vmem>>, vector<2x1xf32>
    %38 = vector.broadcast %37 : vector<2x1xf32> to vector<2x2xf32>
    %39 = arith.addf %36, %38 : vector<2x2xf32>
    %cst_16 = arith.constant 0.000000e+00 : f32
    %40 = vector.broadcast %cst_16 : f32 to vector<2x2xf32>
    %41 = arith.maximumf %39, %40 : vector<2x2xf32>
    %c0_17 = arith.constant 0 : index
    %c0_18 = arith.constant 0 : index
    %42 = vector.load %arg6[%c0_17, %c0_18] : memref<32x2xf32, #tpu.memory_space<vmem>>, vector<32x2xf32>
    %cst_19 = arith.constant dense<0.000000e+00> : vector<32x2xf32>
    %43 = tpu.matmul %42, %41, %cst_19 {dimension_numbers = #tpu.dot_dimension_numbers<[1], [0], [0], [1], [0, 0, 1, 1], [], []>} : vector<32x2xf32>, vector<2x2xf32>, vector<32x2xf32> -> vector<32x2xf32>
    %c0_20 = arith.constant 0 : index
    %c0_21 = arith.constant 0 : index
    %44 = vector.load %arg7[%c0_20, %c0_21] : memref<32x1xf32, #tpu.memory_space<vmem>>, vector<32x1xf32>
    %45 = vector.broadcast %44 : vector<32x1xf32> to vector<32x2xf32>
    %46 = arith.addf %43, %45 : vector<32x2xf32>
    %47 = arith.negf %46 : vector<32x2xf32>
    %48 = math.exp %47 : vector<32x2xf32>
    %cst_22 = arith.constant 1.000000e+00 : f32
    %49 = vector.broadcast %cst_22 : f32 to vector<32x2xf32>
    %50 = arith.addf %49, %48 : vector<32x2xf32>
    %51 = arith.divf %49, %50 : vector<32x2xf32>
    %52 = vector.extract_strided_slice %51 {offsets = [0, 0], sizes = [32, 1], strides = [1, 1]} : vector<32x2xf32> to vector<32x1xf32>
    %53 = vector.broadcast %52 : vector<32x1xf32> to vector<32x256xf32>
    %54 = arith.mulf %14, %53 : vector<32x256xf32>
    %c0_23 = arith.constant 0 : index
    %c0_24 = arith.constant 0 : index
    %c0_25 = arith.constant 0 : index
    %55 = vector.load %arg2[%c0_23, %c0_24, %c0_25] : memref<2x32x256xf32, #tpu.memory_space<vmem>>, vector<1x32x256xf32>
    %56 = vector.shape_cast %55 : vector<1x32x256xf32> to vector<32x256xf32>
    %57 = arith.addf %54, %56 : vector<32x256xf32>
    %c0_26 = arith.constant 0 : index
    %c0_27 = arith.constant 0 : index
    %c0_28 = arith.constant 0 : index
    %58 = vector.load %arg8[%c0_26, %c0_27, %c0_28] : memref<2x32x256xf32, #tpu.memory_space<vmem>>, vector<1x32x256xf32>
    %59 = vector.shape_cast %58 : vector<1x32x256xf32> to vector<32x256xf32>
    %60 = vector.shape_cast %57 : vector<32x256xf32> to vector<1x32x256xf32>
    tpu.vector_store %arg8[%c0_26, %c0_27, %c0_28], %60 {strides = array<i32>} : memref<2x32x256xf32, #tpu.memory_space<vmem>>, vector<1x32x256xf32>,
    %61 = vector.extract_strided_slice %51 {offsets = [0, 1], sizes = [32, 1], strides = [1, 1]} : vector<32x2xf32> to vector<32x1xf32>
    %62 = vector.broadcast %61 : vector<32x1xf32> to vector<32x256xf32>
    %63 = arith.mulf %29, %62 : vector<32x256xf32>
    %c1_29 = arith.constant 1 : index
    %c0_30 = arith.constant 0 : index
    %c0_31 = arith.constant 0 : index
    %64 = vector.load %arg2[%c1_29, %c0_30, %c0_31] : memref<2x32x256xf32, #tpu.memory_space<vmem>>, vector<1x32x256xf32>
    %65 = vector.shape_cast %64 : vector<1x32x256xf32> to vector<32x256xf32>
    %66 = arith.addf %63, %65 : vector<32x256xf32>
    %c1_32 = arith.constant 1 : index
    %c0_33 = arith.constant 0 : index
    %c0_34 = arith.constant 0 : index
    %67 = vector.load %arg8[%c1_32, %c0_33, %c0_34] : memref<2x32x256xf32, #tpu.memory_space<vmem>>, vector<1x32x256xf32>
    %68 = vector.shape_cast %67 : vector<1x32x256xf32> to vector<32x256xf32>
    %69 = vector.shape_cast %66 : vector<32x256xf32> to vector<1x32x256xf32>
    tpu.vector_store %arg8[%c1_32, %c0_33, %c0_34], %69 {strides = array<i32>} : memref<2x32x256xf32, #tpu.memory_space<vmem>>, vector<1x32x256xf32>,
    return
  }
  func.func @transform_0(%arg0: i32) -> (i32, i32, i32) {
    %c0_i32 = arith.constant 0 : i32
    %c0_i32_0 = arith.constant 0 : i32
    %c0_i32_1 = arith.constant 0 : i32
    return %arg0, %c0_i32, %c0_i32_0 : i32, i32, i32
  }
  func.func @transform_1(%arg0: i32) -> (i32, i32, i32) {
    %c0_i32 = arith.constant 0 : i32
    %c0_i32_0 = arith.constant 0 : i32
    %c0_i32_1 = arith.constant 0 : i32
    return %arg0, %c0_i32, %c0_i32_0 : i32, i32, i32
  }
  func.func @transform_2(%arg0: i32) -> (i32, i32) {
    %c0_i32 = arith.constant 0 : i32
    %c0_i32_0 = arith.constant 0 : i32
    %c0_i32_1 = arith.constant 0 : i32
    return %c0_i32, %c0_i32_0 : i32, i32
  }
  func.func @transform_3(%arg0: i32) -> (i32, i32) {
    %c0_i32 = arith.constant 0 : i32
    %c0_i32_0 = arith.constant 0 : i32
    %c0_i32_1 = arith.constant 0 : i32
    return %c0_i32, %c0_i32_0 : i32, i32
  }
  func.func @transform_4(%arg0: i32) -> (i32, i32) {
    %c0_i32 = arith.constant 0 : i32
    %c0_i32_0 = arith.constant 0 : i32
    %c0_i32_1 = arith.constant 0 : i32
    return %c0_i32, %c0_i32_0 : i32, i32
  }
  func.func @transform_5(%arg0: i32) -> (i32, i32) {
    %c0_i32 = arith.constant 0 : i32
    %c0_i32_0 = arith.constant 0 : i32
    %c0_i32_1 = arith.constant 0 : i32
    return %c0_i32, %c0_i32_0 : i32, i32
  }
  func.func @transform_6(%arg0: i32) -> (i32, i32) {
    %c0_i32 = arith.constant 0 : i32
    %c0_i32_0 = arith.constant 0 : i32
    %c0_i32_1 = arith.constant 0 : i32
    return %c0_i32, %c0_i32_0 : i32, i32
  }
  func.func @transform_7(%arg0: i32) -> (i32, i32, i32) {
    %c0_i32 = arith.constant 0 : i32
    %c0_i32_0 = arith.constant 0 : i32
    %c0_i32_1 = arith.constant 0 : i32
    return %arg0, %c0_i32, %c0_i32_0 : i32, i32, i32
  }
}

</mosaic_0001>

<llo_original>
// kernel: context_guided_block.3
$region0: #{context_guided_block.3}
  #allocation0 [shape = 'u32[]', space=smem, size = 0x4, offset = 0x4, fixed_abs, tag = 'smem constant byte address 0x4 - core index']
  #allocation1 [shape = 'u32[72,128]{1,0:T(1,128)}', space=vmem, size = 0x9000, scoped, tag = 'internal scratch']
  %s0 = inlined_call_operand.vmem [shape: f32[2,32,256], index: 0, kind: input, shape index: {}]
  %s1 = inlined_call_operand.vmem [shape: f32[16,32], index: 1, kind: input, shape index: {}]
  %s2 = inlined_call_operand.vmem [shape: f32[16,1], index: 2, kind: input, shape index: {}]
  %s3 = inlined_call_operand.vmem [shape: f32[2,16,256], index: 3, kind: output, shape index: {0}]
  %s4 = inlined_call_operand.vmem [shape: f32[1,16,2], index: 4, kind: output, shape index: {1}]
  %5 = xla_tuple %s3, %s4
  %s6 = sld [smem:[#allocation0]]
  $region30: #{context_guided_block.3} parent=0
    _
  %s8 = ssub.s32 1, %s6
  %s9 = scalar_select 0, %s8, %s6
  // Predicated region
  $region2: #{context_guided_block.3} parent=0 // pred_check
    _
  $region3: #{context_guided_block.3} parent=0 // pred_check_branch
    %11 = sbr.rel (0) target = $region5
  $region4: #{context_guided_block.3} parent=0 // pred_region
    _
  $region5: #{context_guided_block.3} parent=0 // pred_fallthru
    _
  // Predicated region
  $region6: #{context_guided_block.3} parent=0 // pred_check
    _
  $region7: #{context_guided_block.3} parent=0 // pred_check_branch
    %13 = sbr.rel (0) target = $region9
  $region8: #{context_guided_block.3} parent=0 // pred_region
    _
  $region9: #{context_guided_block.3} parent=0 // pred_fallthru
    _
  // Predicated region
  $region10: #{context_guided_block.3} parent=0 // pred_check
    _
  $region11: #{context_guided_block.3} parent=0 // pred_check_branch
    %15 = sbr.rel (0) target = $region13
  $region12: #{context_guided_block.3} parent=0 // pred_region
    _
  $region13: #{context_guided_block.3} parent=0 // pred_fallthru
    _
  %v16 = vld [vmem:[%s1] sm:$0xff]
  %v17 = vld [vmem:[%s1 + $0x8] sm:$0xff]
  %v18 = vld [vmem:[%s2] sm:$0xff]
  %v19 = vld [vmem:[%s2 + $0x8] sm:$0xff]
  %v20 = vld [vmem:[%s0] sm:$0xff]
  %v21 = vld [vmem:[%s0 + $0x8] sm:$0xff]
  %v22 = vld [vmem:[%s0 + $0x10] sm:$0xff]
  %v23 = vld [vmem:[%s0 + $0x18] sm:$0xff]
  %v24 = vld [vmem:[%s0 + $0x20] sm:$0xff]
  %v25 = vld [vmem:[%s0 + $0x28] sm:$0xff]
  %v26 = vld [vmem:[%s0 + $0x30] sm:$0xff]
  %v27 = vld [vmem:[%s0 + $0x38] sm:$0xff]
  %29 = vset.pattern.permute.xlu0 0
  %30 = vperm.xlu0 %29, %v18
  %v31 = vpop.permute.xlu0 %30
  %34 = vset.pattern.permute.xlu0 0
  %35 = vperm.xlu0 %34, %v19
  %v36 = vpop.permute.xlu0 %35
  %vm38 = vcmask 261120
  %v40 = vsel %vm38, %v16, 0
  %v43 = vsel %vm38, %v17, 0
  %45 = vmatpush.msra.mxu0 0.0
  %46 = vmatpush.msra.mxu0 0.0
  %47 = vmatpush.msra.mxu0 0.0
  %48 = vmatpush.msra.mxu0 0.0
  %49 = vmatpush.msra.mxu0 0.0
  %50 = vmatpush.msra.mxu0 0.0
  %51 = vmatpush.msra.mxu0 0.0
  %52 = vmatpush.msra.mxu0 0.0
  %53 = vmatpush.msra.mxu0 0.0
  %54 = vmatpush.msra.mxu0 0.0
  %55 = vmatpush.msra.mxu0 0.0
  %56 = vmatpush.msra.mxu0 0.0
  %57 = vmatpush.msra.mxu0 %v26
  %58 = vmatpush.msra.mxu0 %v24
  %59 = vmatpush.msra.mxu0 %v22
  %60 = vmatpush.msra.mxu0 %v20
  %61 = vmatmul.f32.gmra.mxu0 %v40
  %v62 = vpop.f32.mrf.mxu0
  %v63 = vadd.f32 %v31, %v62
  %64 = vmatmul.f32.gmra.mxu0 %v43
  %v65 = vpop.f32.mrf.mxu0
  %v66 = vadd.f32 %v36, %v65
  %67 = vdwg.mxu0
  %68 = vmatpush.msra.mxu0 0.0
  %69 = vmatpush.msra.mxu0 0.0
  %70 = vmatpush.msra.mxu0 0.0
  %71 = vmatpush.msra.mxu0 0.0
  %72 = vmatpush.msra.mxu0 0.0
  %73 = vmatpush.msra.mxu0 0.0
  %74 = vmatpush.msra.mxu0 0.0
  %75 = vmatpush.msra.mxu0 0.0
  %76 = vmatpush.msra.mxu0 0.0
  %77 = vmatpush.msra.mxu0 0.0
  %78 = vmatpush.msra.mxu0 0.0
  %79 = vmatpush.msra.mxu0 0.0
  %80 = vmatpush.msra.mxu0 %v27
  %81 = vmatpush.msra.mxu0 %v25
  %82 = vmatpush.msra.mxu0 %v23
  %83 = vmatpush.msra.mxu0 %v21
  %84 = vmatmul.f32.gmra.mxu0 %v40
  %v85 = vpop.f32.mrf.mxu0
  %v86 = vadd.f32 %v31, %v85
  %87 = vmatmul.f32.gmra.mxu0 %v43
  %v88 = vpop.f32.mrf.mxu0
  %v89 = vadd.f32 %v36, %v88
  %90 = vdwg.mxu0
  %91 = vst [vmem:[%s3] sm:$0xff] %v63
  %92 = vst [vmem:[%s3 + $0x8] sm:$0xff] %v86
  %93 = vst [vmem:[%s3 + $0x10] sm:$0xff] %v66
  %94 = vst [vmem:[%s3 + $0x18] sm:$0xff] %v89
  %v95 = vadd.f32 %v63, %v86
  %96 = vadd.xlane.f32.xlu0 %v95
  %v97 = vpop.xlane.xlu0 %96
  %v98 = vadd.f32 %v66, %v89
  %99 = vadd.xlane.f32.xlu0 %v98
  %v100 = vpop.xlane.xlu0 %99
  %v101 = vadd.f32 %v97, 0.0
  %v102 = vadd.f32 %v100, 0.0
  %v103 = vmul.f32 %v63, %v63
  %v104 = vmul.f32 %v86, %v86
  %v105 = vmul.f32 %v66, %v66
  %v106 = vmul.f32 %v89, %v89
  %v107 = vadd.f32 %v103, %v104
  %108 = vadd.xlane.f32.xlu0 %v107
  %v109 = vpop.xlane.xlu0 %108
  %v110 = vadd.f32 %v105, %v106
  %111 = vadd.xlane.f32.xlu0 %v110
  %v112 = vpop.xlane.xlu0 %111
  %v113 = vadd.f32 %v109, 0.0
  %v114 = vadd.f32 %v112, 0.0
  %s115 = scalar_lea.vmem %s0, 64
  %v116 = vld [vmem:[%s115] sm:$0xff]
  %v117 = vld [vmem:[%s115 + $0x8] sm:$0xff]
  %v118 = vld [vmem:[%s115 + $0x10] sm:$0xff]
  %v119 = vld [vmem:[%s115 + $0x18] sm:$0xff]
  %v120 = vld [vmem:[%s115 + $0x20] sm:$0xff]
  %v121 = vld [vmem:[%s115 + $0x28] sm:$0xff]
  %v122 = vld [vmem:[%s115 + $0x30] sm:$0xff]
  %v123 = vld [vmem:[%s115 + $0x38] sm:$0xff]
  %124 = vmatpush.msra.mxu0 0.0
  %125 = vmatpush.msra.mxu0 0.0
  %126 = vmatpush.msra.mxu0 0.0
  %127 = vmatpush.msra.mxu0 0.0
  %128 = vmatpush.msra.mxu0 0.0
  %129 = vmatpush.msra.mxu0 0.0
  %130 = vmatpush.msra.mxu0 0.0
  %131 = vmatpush.msra.mxu0 0.0
  %132 = vmatpush.msra.mxu0 0.0
  %133 = vmatpush.msra.mxu0 0.0
  %134 = vmatpush.msra.mxu0 0.0
  %135 = vmatpush.msra.mxu0 0.0
  %136 = vmatpush.msra.mxu0 %v122
  %137 = vmatpush.msra.mxu0 %v120
  %138 = vmatpush.msra.mxu0 %v118
  %139 = vmatpush.msra.mxu0 %v116
  %140 = vmatmul.f32.gmra.mxu0 %v40
  %v141 = vpop.f32.mrf.mxu0
  %v142 = vadd.f32 %v31, %v141
  %143 = vmatmul.f32.gmra.mxu0 %v43
  %v144 = vpop.f32.mrf.mxu0
  %v145 = vadd.f32 %v36, %v144
  %146 = vdwg.mxu0
  %147 = vmatpush.msra.mxu0 0.0
  %148 = vmatpush.msra.mxu0 0.0
  %149 = vmatpush.msra.mxu0 0.0
  %150 = vmatpush.msra.mxu0 0.0
  %151 = vmatpush.msra.mxu0 0.0
  %152 = vmatpush.msra.mxu0 0.0
  %153 = vmatpush.msra.mxu0 0.0
  %154 = vmatpush.msra.mxu0 0.0
  %155 = vmatpush.msra.mxu0 0.0
  %156 = vmatpush.msra.mxu0 0.0
  %157 = vmatpush.msra.mxu0 0.0
  %158 = vmatpush.msra.mxu0 0.0
  %159 = vmatpush.msra.mxu0 %v123
  %160 = vmatpush.msra.mxu0 %v121
  %161 = vmatpush.msra.mxu0 %v119
  %162 = vmatpush.msra.mxu0 %v117
  %163 = vmatmul.f32.gmra.mxu0 %v40
  %v164 = vpop.f32.mrf.mxu0
  %v165 = vadd.f32 %v31, %v164
  %166 = vmatmul.f32.gmra.mxu0 %v43
  %v167 = vpop.f32.mrf.mxu0
  %v168 = vadd.f32 %v36, %v167
  %169 = vdwg.mxu0
  %s170 = scalar_lea.vmem %s3, 32
  %171 = vst [vmem:[%s170] sm:$0xff] %v142
  %172 = vst [vmem:[%s170 + $0x8] sm:$0xff] %v165
  %173 = vst [vmem:[%s170 + $0x10] sm:$0xff] %v145
  %174 = vst [vmem:[%s170 + $0x18] sm:$0xff] %v168
  %v175 = vadd.f32 %v142, %v165
  %176 = vadd.xlane.f32.xlu0 %v175
  %v177 = vpop.xlane.xlu0 %176
  %v178 = vadd.f32 %v145, %v168
  %179 = vadd.xlane.f32.xlu0 %v178
  %v180 = vpop.xlane.xlu0 %179
  %v181 = vadd.f32 %v101, %v177
  %v182 = vadd.f32 %v102, %v180
  %v183 = vmul.f32 %v142, %v142
  %v184 = vmul.f32 %v165, %v165
  %v185 = vmul.f32 %v145, %v145
  %v186 = vmul.f32 %v168, %v168
  %v187 = vadd.f32 %v183, %v184
  %188 = vadd.xlane.f32.xlu0 %v187
  %v189 = vpop.xlane.xlu0 %188
  %v190 = vadd.f32 %v185, %v186
  %191 = vadd.xlane.f32.xlu0 %v190
  %v192 = vpop.xlane.xlu0 %191
  %v193 = vadd.f32 %v113, %v189
  %v194 = vadd.f32 %v114, %v192
  %vm195 = vcmask 7168
  %v196 = vsel %vm195, %v181, %v193
  %v197 = vsel %vm195, %v182, %v194
  %vm198 = vcmask 15360
  %199 = vst.msk [vmem:[%s4] sm:$0xff] %vm198, %v196
  %200 = vst.msk [vmem:[%s4 + $0x8] sm:$0xff] %vm198, %v197
  // Predicated region
  $region14: #{context_guided_block.3} parent=0 // pred_check
    _
  $region15: #{context_guided_block.3} parent=0 // pred_check_branch
    %202 = sbr.rel (0) target = $region17
  $region16: #{context_guided_block.3} parent=0 // pred_region
    _
  $region17: #{context_guided_block.3} parent=0 // pred_fallthru
    _
  // Predicated region
  $region18: #{context_guided_block.3} parent=0 // pred_check
    _
  $region19: #{context_guided_block.3} parent=0 // pred_check_branch
    %204 = sbr.rel (0) target = $region21
  $region20: #{context_guided_block.3} parent=0 // pred_region
    _
  $region21: #{context_guided_block.3} parent=0 // pred_fallthru
    _
  // Predicated region
  $region22: #{context_guided_block.3} parent=0 // pred_check
    _
  $region23: #{context_guided_block.3} parent=0 // pred_check_branch
    %206 = sbr.rel (0) target = $region25
  $region24: #{context_guided_block.3} parent=0 // pred_region
    _
  $region25: #{context_guided_block.3} parent=0 // pred_fallthru
    _
  // Predicated region
  $region26: #{context_guided_block.3} parent=0 // pred_check
    _
  $region27: #{context_guided_block.3} parent=0 // pred_check_branch
    %208 = sbr.rel (0) target = $region29
  $region28: #{context_guided_block.3} parent=0 // pred_region
    _
  $region29: #{context_guided_block.3} parent=0 // pred_fallthru
    _

// kernel: context_guided_block.5
$region0: #{context_guided_block.5}
  #allocation0 [shape = 'u32[]', space=smem, size = 0x4, offset = 0x4, fixed_abs, tag = 'smem constant byte address 0x4 - core index']
  #allocation1 [shape = 'u32[72,128]{1,0:T(1,128)}', space=vmem, size = 0x9000, scoped, tag = 'internal scratch']
  %s0 = inlined_call_operand.vmem [shape: f32[2,32,256], index: 0, kind: input, shape index: {}]
  %s1 = inlined_call_operand.vmem [shape: f32[2,32,256], index: 1, kind: input, shape index: {}]
  %s2 = inlined_call_operand.vmem [shape: f32[32,3], index: 2, kind: input, shape index: {}]
  %s3 = inlined_call_operand.vmem [shape: f32[2,32], index: 3, kind: input, shape index: {}]
  %s4 = inlined_call_operand.vmem [shape: f32[2,1], index: 4, kind: input, shape index: {}]
  %s5 = inlined_call_operand.vmem [shape: f32[32,2], index: 5, kind: input, shape index: {}]
  %s6 = inlined_call_operand.vmem [shape: f32[32,1], index: 6, kind: input, shape index: {}]
  %s7 = inlined_call_operand.vmem [shape: f32[2,32,256], index: 7, kind: output, shape index: {}]
  %s8 = sld [smem:[#allocation0]]
  $region38: #{context_guided_block.5} parent=0
    _
  %s10 = ssub.s32 1, %s8
  %s11 = scalar_select 0, %s10, %s8
  // Predicated region
  $region2: #{context_guided_block.5} parent=0 // pred_check
    _
  $region3: #{context_guided_block.5} parent=0 // pred_check_branch
    %13 = sbr.rel (0) target = $region5
  $region4: #{context_guided_block.5} parent=0 // pred_region
    _
  $region5: #{context_guided_block.5} parent=0 // pred_fallthru
    _
  // Predicated region
  $region6: #{context_guided_block.5} parent=0 // pred_check
    _
  $region7: #{context_guided_block.5} parent=0 // pred_check_branch
    %15 = sbr.rel (0) target = $region9
  $region8: #{context_guided_block.5} parent=0 // pred_region
    _
  $region9: #{context_guided_block.5} parent=0 // pred_fallthru
    _
  // Predicated region
  $region10: #{context_guided_block.5} parent=0 // pred_check
    _
  $region11: #{context_guided_block.5} parent=0 // pred_check_branch
    %17 = sbr.rel (0) target = $region13
  $region12: #{context_guided_block.5} parent=0 // pred_region
    _
  $region13: #{context_guided_block.5} parent=0 // pred_fallthru
    _
  // Predicated region
  $region14: #{context_guided_block.5} parent=0 // pred_check
    _
  $region15: #{context_guided_block.5} parent=0 // pred_check_branch
    %19 = sbr.rel (0) target = $region17
  $region16: #{context_guided_block.5} parent=0 // pred_region
    _
  $region17: #{context_guided_block.5} parent=0 // pred_fallthru
    _
  // Predicated region
  $region18: #{context_guided_block.5} parent=0 // pred_check
    _
  $region19: #{context_guided_block.5} parent=0 // pred_check_branch
    %21 = sbr.rel (0) target = $region21
  $region20: #{context_guided_block.5} parent=0 // pred_region
    _
  $region21: #{context_guided_block.5} parent=0 // pred_fallthru
    _
  // Predicated region
  $region22: #{context_guided_block.5} parent=0 // pred_check
    _
  $region23: #{context_guided_block.5} parent=0 // pred_check_branch
    %23 = sbr.rel (0) target = $region25
  $region24: #{context_guided_block.5} parent=0 // pred_region
    _
  $region25: #{context_guided_block.5} parent=0 // pred_fallthru
    _
  // Predicated region
  $region26: #{context_guided_block.5} parent=0 // pred_check
    _
  $region27: #{context_guided_block.5} parent=0 // pred_check_branch
    %25 = sbr.rel (0) target = $region29
  $region28: #{context_guided_block.5} parent=0 // pred_region
    _
  $region29: #{context_guided_block.5} parent=0 // pred_fallthru
    _
  %v26 = vld [vmem:[%s2] sm:$0xff]
  %v27 = vld [vmem:[%s2 + $0x8] sm:$0xff]
  %v28 = vld [vmem:[%s2 + $0x10] sm:$0xff]
  %v29 = vld [vmem:[%s2 + $0x18] sm:$0xff]
  %v30 = vld [vmem:[%s0] sm:$0xff]
  %v31 = vld [vmem:[%s0 + $0x8] sm:$0xff]
  %v32 = vld [vmem:[%s0 + $0x10] sm:$0xff]
  %v33 = vld [vmem:[%s0 + $0x18] sm:$0xff]
  %v34 = vld [vmem:[%s0 + $0x20] sm:$0xff]
  %v35 = vld [vmem:[%s0 + $0x28] sm:$0xff]
  %v36 = vld [vmem:[%s0 + $0x30] sm:$0xff]
  %v37 = vld [vmem:[%s0 + $0x38] sm:$0xff]
  %39 = vset.pattern.permute.xlu0 0
  %40 = vperm.xlu0 %39, %v26
  %v41 = vpop.permute.xlu0 %40
  %44 = vset.pattern.permute.xlu0 0
  %45 = vperm.xlu0 %44, %v27
  %v46 = vpop.permute.xlu0 %45
  %49 = vset.pattern.permute.xlu0 0
  %50 = vperm.xlu0 %49, %v28
  %v51 = vpop.permute.xlu0 %50
  %54 = vset.pattern.permute.xlu0 0
  %55 = vperm.xlu0 %54, %v29
  %v56 = vpop.permute.xlu0 %55
  %v58 = vmul.f32 %v30, %v41
  %v59 = vmul.f32 %v31, %v41
  %v60 = vmul.f32 %v32, %v46
  %v61 = vmul.f32 %v33, %v46
  %v62 = vmul.f32 %v34, %v51
  %v63 = vmul.f32 %v35, %v51
  %v64 = vmul.f32 %v36, %v56
  %v65 = vmul.f32 %v37, %v56
  %66 = vset.pattern.permute.xlu0 1
  %67 = vperm.xlu0 %66, %v26
  %v68 = vpop.permute.xlu0 %67
  %70 = vset.pattern.permute.xlu0 1
  %71 = vperm.xlu0 %70, %v27
  %v72 = vpop.permute.xlu0 %71
  %74 = vset.pattern.permute.xlu0 1
  %75 = vperm.xlu0 %74, %v28
  %v76 = vpop.permute.xlu0 %75
  %78 = vset.pattern.permute.xlu0 1
  %79 = vperm.xlu0 %78, %v29
  %v80 = vpop.permute.xlu0 %79
  %v82 = vadd.f32 %v58, %v68
  %v83 = vadd.f32 %v59, %v68
  %v84 = vadd.f32 %v60, %v72
  %v85 = vadd.f32 %v61, %v72
  %v86 = vadd.f32 %v62, %v76
  %v87 = vadd.f32 %v63, %v76
  %v88 = vadd.f32 %v64, %v80
  %v89 = vadd.f32 %v65, %v80
  %vm90 = vcmp.gt.f32.partialorder %v82, 0.0
  %vm91 = vcmp.gt.f32.partialorder %v83, 0.0
  %vm92 = vcmp.gt.f32.partialorder %v84, 0.0
  %vm93 = vcmp.gt.f32.partialorder %v85, 0.0
  %vm94 = vcmp.gt.f32.partialorder %v86, 0.0
  %vm95 = vcmp.gt.f32.partialorder %v87, 0.0
  %vm96 = vcmp.gt.f32.partialorder %v88, 0.0
  %vm97 = vcmp.gt.f32.partialorder %v89, 0.0
  %98 = vset.pattern.permute.xlu0 2
  %99 = vperm.xlu0 %98, %v26
  %v100 = vpop.permute.xlu0 %99
  %102 = vset.pattern.permute.xlu0 2
  %103 = vperm.xlu0 %102, %v27
  %v104 = vpop.permute.xlu0 %103
  %106 = vset.pattern.permute.xlu0 2
  %107 = vperm.xlu0 %106, %v28
  %v108 = vpop.permute.xlu0 %107
  %110 = vset.pattern.permute.xlu0 2
  %111 = vperm.xlu0 %110, %v29
  %v112 = vpop.permute.xlu0 %111
  %v114 = vmul.f32 %v100, %v82
  %v115 = vmul.f32 %v100, %v83
  %v116 = vmul.f32 %v104, %v84
  %v117 = vmul.f32 %v104, %v85
  %v118 = vmul.f32 %v108, %v86
  %v119 = vmul.f32 %v108, %v87
  %v120 = vmul.f32 %v112, %v88
  %v121 = vmul.f32 %v112, %v89
  %v122 = vsel %vm90, %v82, %v114
  %v123 = vsel %vm91, %v83, %v115
  %v124 = vsel %vm92, %v84, %v116
  %v125 = vsel %vm93, %v85, %v117
  %v126 = vsel %vm94, %v86, %v118
  %v127 = vsel %vm95, %v87, %v119
  %v128 = vsel %vm96, %v88, %v120
  %v129 = vsel %vm97, %v89, %v121
  %v130 = vadd.f32 %v122, %v123
  %131 = vadd.xlane.f32.xlu0 %v130
  %v132 = vpop.xlane.xlu0 %131
  %v133 = vadd.f32 %v124, %v125
  %134 = vadd.xlane.f32.xlu0 %v133
  %v135 = vpop.xlane.xlu0 %134
  %v136 = vadd.f32 %v126, %v127
  %137 = vadd.xlane.f32.xlu0 %v136
  %v138 = vpop.xlane.xlu0 %137
  %v139 = vadd.f32 %v128, %v129
  %140 = vadd.xlane.f32.xlu0 %v139
  %v141 = vpop.xlane.xlu0 %140
  %v142 = vmul.f32 %v132, 0.00390625
  %v143 = vmul.f32 %v135, 0.00390625
  %v144 = vmul.f32 %v138, 0.00390625
  %v145 = vmul.f32 %v141, 0.00390625
  %s146 = scalar_lea.vmem %s0, 64
  %v147 = vld [vmem:[%s146] sm:$0xff]
  %v148 = vld [vmem:[%s146 + $0x8] sm:$0xff]
  %v149 = vld [vmem:[%s146 + $0x10] sm:$0xff]
  %v150 = vld [vmem:[%s146 + $0x18] sm:$0xff]
  %v151 = vld [vmem:[%s146 + $0x20] sm:$0xff]
  %v152 = vld [vmem:[%s146 + $0x28] sm:$0xff]
  %v153 = vld [vmem:[%s146 + $0x30] sm:$0xff]
  %v154 = vld [vmem:[%s146 + $0x38] sm:$0xff]
  %v155 = vmul.f32 %v147, %v41
  %v156 = vmul.f32 %v148, %v41
  %v157 = vmul.f32 %v149, %v46
  %v158 = vmul.f32 %v150, %v46
  %v159 = vmul.f32 %v151, %v51
  %v160 = vmul.f32 %v152, %v51
  %v161 = vmul.f32 %v153, %v56
  %v162 = vmul.f32 %v154, %v56
  %v163 = vadd.f32 %v155, %v68
  %v164 = vadd.f32 %v156, %v68
  %v165 = vadd.f32 %v157, %v72
  %v166 = vadd.f32 %v158, %v72
  %v167 = vadd.f32 %v159, %v76
  %v168 = vadd.f32 %v160, %v76
  %v169 = vadd.f32 %v161, %v80
  %v170 = vadd.f32 %v162, %v80
  %vm171 = vcmp.gt.f32.partialorder %v163, 0.0
  %vm172 = vcmp.gt.f32.partialorder %v164, 0.0
  %vm173 = vcmp.gt.f32.partialorder %v165, 0.0
  %vm174 = vcmp.gt.f32.partialorder %v166, 0.0
  %vm175 = vcmp.gt.f32.partialorder %v167, 0.0
  %vm176 = vcmp.gt.f32.partialorder %v168, 0.0
  %vm177 = vcmp.gt.f32.partialorder %v169, 0.0
  %vm178 = vcmp.gt.f32.partialorder %v170, 0.0
  %v179 = vmul.f32 %v100, %v163
  %v180 = vmul.f32 %v100, %v164
  %v181 = vmul.f32 %v104, %v165
  %v182 = vmul.f32 %v104, %v166
  %v183 = vmul.f32 %v108, %v167
  %v184 = vmul.f32 %v108, %v168
  %v185 = vmul.f32 %v112, %v169
  %v186 = vmul.f32 %v112, %v170
  %v187 = vsel %vm171, %v163, %v179
  %v188 = vsel %vm172, %v164, %v180
  %v189 = vsel %vm173, %v165, %v181
  %v190 = vsel %vm174, %v166, %v182
  %v191 = vsel %vm175, %v167, %v183
  %v192 = vsel %vm176, %v168, %v184
  %v193 = vsel %vm177, %v169, %v185
  %v194 = vsel %vm178, %v170, %v186
  %v195 = vadd.f32 %v187, %v188
  %196 = vadd.xlane.f32.xlu0 %v195
  %v197 = vpop.xlane.xlu0 %196
  %v198 = vadd.f32 %v189, %v190
  %199 = vadd.xlane.f32.xlu0 %v198
  %v200 = vpop.xlane.xlu0 %199
  %v201 = vadd.f32 %v191, %v192
  %202 = vadd.xlane.f32.xlu0 %v201
  %v203 = vpop.xlane.xlu0 %202
  %v204 = vadd.f32 %v193, %v194
  %205 = vadd.xlane.f32.xlu0 %v204
  %v206 = vpop.xlane.xlu0 %205
  %v207 = vmul.f32 %v197, 0.00390625
  %v208 = vmul.f32 %v200, 0.00390625
  %v209 = vmul.f32 %v203, 0.00390625
  %v210 = vmul.f32 %v206, 0.00390625
  %vm211 = vcmask 7168
  %v212 = vsel %vm211, %v142, %v207
  %v213 = vsel %vm211, %v143, %v208
  %v214 = vsel %vm211, %v144, %v209
  %v215 = vsel %vm211, %v145, %v210
  %v216 = vld [vmem:[%s3] sm:$0x3]
  %v217 = vld [vmem:[%s4] sm:$0x3]
  %219 = vset.pattern.permute.xlu0 0
  %220 = vperm.xlu0 %219, %v217
  %v221 = vpop.permute.xlu0 %220
  %vm223 = vcmask 261120
  %v225 = vsel %vm223, %v216, 0
  %227 = vmatpush.msra.mxu0 0.0
  %228 = vmatpush.msra.mxu0 0.0
  %229 = vmatpush.msra.mxu0 0.0
  %230 = vmatpush.msra.mxu0 0.0
  %231 = vmatpush.msra.mxu0 0.0
  %232 = vmatpush.msra.mxu0 0.0
  %233 = vmatpush.msra.mxu0 0.0
  %234 = vmatpush.msra.mxu0 0.0
  %235 = vmatpush.msra.mxu0 0.0
  %236 = vmatpush.msra.mxu0 0.0
  %237 = vmatpush.msra.mxu0 0.0
  %238 = vmatpush.msra.mxu0 0.0
  %239 = vmatpush.msra.mxu0 %v215
  %240 = vmatpush.msra.mxu0 %v214
  %241 = vmatpush.msra.mxu0 %v213
  %242 = vmatpush.msra.mxu0 %v212
  %243 = vmatmul.f32.gmra.mxu0 %v225
  %v244 = vpop.f32.mrf.mxu0
  %v245 = vadd.f32 %v221, %v244
  %246 = vdwg.mxu0
  %v247 = vmax.f32 %v245, 0.0
  %v248 = vld [vmem:[%s5] sm:$0xff]
  %v249 = vld [vmem:[%s5 + $0x8] sm:$0xff]
  %v250 = vld [vmem:[%s5 + $0x10] sm:$0xff]
  %v251 = vld [vmem:[%s5 + $0x18] sm:$0xff]
  %v252 = vld [vmem:[%s6] sm:$0xff]
  %v253 = vld [vmem:[%s6 + $0x8] sm:$0xff]
  %v254 = vld [vmem:[%s6 + $0x10] sm:$0xff]
  %v255 = vld [vmem:[%s6 + $0x18] sm:$0xff]
  %257 = vset.pattern.permute.xlu0 0
  %258 = vperm.xlu0 %257, %v252
  %v259 = vpop.permute.xlu0 %258
  %262 = vset.pattern.permute.xlu0 0
  %263 = vperm.xlu0 %262, %v253
  %v264 = vpop.permute.xlu0 %263
  %267 = vset.pattern.permute.xlu0 0
  %268 = vperm.xlu0 %267, %v254
  %v269 = vpop.permute.xlu0 %268
  %272 = vset.pattern.permute.xlu0 0
  %273 = vperm.xlu0 %272, %v255
  %v274 = vpop.permute.xlu0 %273
  %vm276 = vcmask 15360
  %v278 = vsel %vm276, %v248, 0
  %v281 = vsel %vm276, %v249, 0
  %v284 = vsel %vm276, %v250, 0
  %v287 = vsel %vm276, %v251, 0
  %vm289 = vcmask 1041408
  %v291 = vsel %vm289, %v247, 0
  %293 = vmatpush.msra.mxu0 0.0
  %294 = vmatpush.msra.mxu0 0.0
  %295 = vmatpush.msra.mxu0 0.0
  %296 = vmatpush.msra.mxu0 0.0
  %297 = vmatpush.msra.mxu0 0.0
  %298 = vmatpush.msra.mxu0 0.0
  %299 = vmatpush.msra.mxu0 0.0
  %300 = vmatpush.msra.mxu0 0.0
  %301 = vmatpush.msra.mxu0 0.0
  %302 = vmatpush.msra.mxu0 0.0
  %303 = vmatpush.msra.mxu0 0.0
  %304 = vmatpush.msra.mxu0 0.0
  %305 = vmatpush.msra.mxu0 0.0
  %306 = vmatpush.msra.mxu0 0.0
  %307 = vmatpush.msra.mxu0 0.0
  %308 = vmatpush.msra.mxu0 %v291
  %309 = vmatmul.f32.gmra.mxu0 %v278
  %v310 = vpop.f32.mrf.mxu0
  %v311 = vadd.f32 %v259, %v310
  %312 = vmatmul.f32.gmra.mxu0 %v281
  %v313 = vpop.f32.mrf.mxu0
  %v314 = vadd.f32 %v264, %v313
  %315 = vmatmul.f32.gmra.mxu0 %v284
  %v316 = vpop.f32.mrf.mxu0
  %v317 = vadd.f32 %v269, %v316
  %318 = vmatmul.f32.gmra.mxu0 %v287
  %v319 = vpop.f32.mrf.mxu0
  %v320 = vadd.f32 %v274, %v319
  %321 = vdwg.mxu0
  %v322 = vxor.u32 %v311, 2147483648
  %v323 = vxor.u32 %v314, 2147483648
  %v324 = vxor.u32 %v317, 2147483648
  %v325 = vxor.u32 %v320, 2147483648
  %v326 = vmul.f32 %v322, 1.442695
  %v327 = vpow.pop %v326
  %v328 = vmul.f32 %v323, 1.442695
  %v329 = vpow.pop %v328
  %v330 = vmul.f32 %v324, 1.442695
  %v331 = vpow.pop %v330
  %v332 = vmul.f32 %v325, 1.442695
  %v333 = vpow.pop %v332
  %v334 = vadd.f32 %v327, 1.0
  %v335 = vadd.f32 %v329, 1.0
  %v336 = vadd.f32 %v331, 1.0
  %v337 = vadd.f32 %v333, 1.0
  %v338 = vrcp.pop %v334
  %v339 = vmul.f32 %v334, %v338
  %v340 = vsub.f32 1.0, %v339
  %v341 = vmul.f32 %v338, %v340
  %v342 = vadd.f32 %v338, %v341
  %vm343 = vweird.f32 %v334
  %vm344 = vweird.f32 %v338
  %vm345 = vmor %vm343, %vm344
  %v346 = vsel %vm345, %v338, %v342
  %v347 = vand.u32 2147483647, %v334
  %vm348 = vcmp.eq.f32.partialorder %v347, 8.507059e+37
  %v349 = vand.u32 %v334, 2147483648
  %v350 = vor.u32 1.1754944e-38, %v349
  %v351 = vsel %vm348, %v350, %v346
  %v352 = vmul.f32 1.0, %v351
  %v353 = vrcp.pop %v335
  %v354 = vmul.f32 %v335, %v353
  %v355 = vsub.f32 1.0, %v354
  %v356 = vmul.f32 %v353, %v355
  %v357 = vadd.f32 %v353, %v356
  %vm358 = vweird.f32 %v335
  %vm359 = vweird.f32 %v353
  %vm360 = vmor %vm358, %vm359
  %v361 = vsel %vm360, %v353, %v357
  %v362 = vand.u32 2147483647, %v335
  %vm363 = vcmp.eq.f32.partialorder %v362, 8.507059e+37
  %v364 = vand.u32 %v335, 2147483648
  %v365 = vor.u32 1.1754944e-38, %v364
  %v366 = vsel %vm363, %v365, %v361
  %v367 = vmul.f32 1.0, %v366
  %v368 = vrcp.pop %v336
  %v369 = vmul.f32 %v336, %v368
  %v370 = vsub.f32 1.0, %v369
  %v371 = vmul.f32 %v368, %v370
  %v372 = vadd.f32 %v368, %v371
  %vm373 = vweird.f32 %v336
  %vm374 = vweird.f32 %v368
  %vm375 = vmor %vm373, %vm374
  %v376 = vsel %vm375, %v368, %v372
  %v377 = vand.u32 2147483647, %v336
  %vm378 = vcmp.eq.f32.partialorder %v377, 8.507059e+37
  %v379 = vand.u32 %v336, 2147483648
  %v380 = vor.u32 1.1754944e-38, %v379
  %v381 = vsel %vm378, %v380, %v376
  %v382 = vmul.f32 1.0, %v381
  %v383 = vrcp.pop %v337
  %v384 = vmul.f32 %v337, %v383
  %v385 = vsub.f32 1.0, %v384
  %v386 = vmul.f32 %v383, %v385
  %v387 = vadd.f32 %v383, %v386
  %vm388 = vweird.f32 %v337
  %vm389 = vweird.f32 %v383
  %vm390 = vmor %vm388, %vm389
  %v391 = vsel %vm390, %v383, %v387
  %v392 = vand.u32 2147483647, %v337
  %vm393 = vcmp.eq.f32.partialorder %v392, 8.507059e+37
  %v394 = vand.u32 %v337, 2147483648
  %v395 = vor.u32 1.1754944e-38, %v394
  %v396 = vsel %vm393, %v395, %v391
  %v397 = vmul.f32 1.0, %v396
  %399 = vset.pattern.permute.xlu0 0
  %400 = vperm.xlu0 %399, %v352
  %v401 = vpop.permute.xlu0 %400
  %404 = vset.pattern.permute.xlu0 0
  %405 = vperm.xlu0 %404, %v367
  %v406 = vpop.permute.xlu0 %405
  %409 = vset.pattern.permute.xlu0 0
  %410 = vperm.xlu0 %409, %v382
  %v411 = vpop.permute.xlu0 %410
  %414 = vset.pattern.permute.xlu0 0
  %415 = vperm.xlu0 %414, %v397
  %v416 = vpop.permute.xlu0 %415
  %v418 = vmul.f32 %v122, %v401
  %v419 = vmul.f32 %v123, %v401
  %v420 = vmul.f32 %v124, %v406
  %v421 = vmul.f32 %v125, %v406
  %v422 = vmul.f32 %v126, %v411
  %v423 = vmul.f32 %v127, %v411
  %v424 = vmul.f32 %v128, %v416
  %v425 = vmul.f32 %v129, %v416
  %v426 = vld [vmem:[%s1] sm:$0xff]
  %v427 = vld [vmem:[%s1 + $0x8] sm:$0xff]
  %v428 = vld [vmem:[%s1 + $0x10] sm:$0xff]
  %v429 = vld [vmem:[%s1 + $0x18] sm:$0xff]
  %v430 = vld [vmem:[%s1 + $0x20] sm:$0xff]
  %v431 = vld [vmem:[%s1 + $0x28] sm:$0xff]
  %v432 = vld [vmem:[%s1 + $0x30] sm:$0xff]
  %v433 = vld [vmem:[%s1 + $0x38] sm:$0xff]
  %v434 = vadd.f32 %v418, %v426
  %v435 = vadd.f32 %v419, %v427
  %v436 = vadd.f32 %v420, %v428
  %v437 = vadd.f32 %v421, %v429
  %v438 = vadd.f32 %v422, %v430
  %v439 = vadd.f32 %v423, %v431
  %v440 = vadd.f32 %v424, %v432
  %v441 = vadd.f32 %v425, %v433
  %442 = vst [vmem:[%s7] sm:$0xff] %v434
  %443 = vst [vmem:[%s7 + $0x8] sm:$0xff] %v435
  %444 = vst [vmem:[%s7 + $0x10] sm:$0xff] %v436
  %445 = vst [vmem:[%s7 + $0x18] sm:$0xff] %v437
  %446 = vst [vmem:[%s7 + $0x20] sm:$0xff] %v438
  %447 = vst [vmem:[%s7 + $0x28] sm:$0xff] %v439
  %448 = vst [vmem:[%s7 + $0x30] sm:$0xff] %v440
  %449 = vst [vmem:[%s7 + $0x38] sm:$0xff] %v441
  %450 = vset.pattern.permute.xlu0 1
  %451 = vperm.xlu0 %450, %v352
  %v452 = vpop.permute.xlu0 %451
  %454 = vset.pattern.permute.xlu0 1
  %455 = vperm.xlu0 %454, %v367
  %v456 = vpop.permute.xlu0 %455
  %458 = vset.pattern.permute.xlu0 1
  %459 = vperm.xlu0 %458, %v382
  %v460 = vpop.permute.xlu0 %459
  %462 = vset.pattern.permute.xlu0 1
  %463 = vperm.xlu0 %462, %v397
  %v464 = vpop.permute.xlu0 %463
  %v466 = vmul.f32 %v187, %v452
  %v467 = vmul.f32 %v188, %v452
  %v468 = vmul.f32 %v189, %v456
  %v469 = vmul.f32 %v190, %v456
  %v470 = vmul.f32 %v191, %v460
  %v471 = vmul.f32 %v192, %v460
  %v472 = vmul.f32 %v193, %v464
  %v473 = vmul.f32 %v194, %v464
  %s474 = scalar_lea.vmem %s1, 64
  %v475 = vld [vmem:[%s474] sm:$0xff]
  %v476 = vld [vmem:[%s474 + $0x8] sm:$0xff]
  %v477 = vld [vmem:[%s474 + $0x10] sm:$0xff]
  %v478 = vld [vmem:[%s474 + $0x18] sm:$0xff]
  %v479 = vld [vmem:[%s474 + $0x20] sm:$0xff]
  %v480 = vld [vmem:[%s474 + $0x28] sm:$0xff]
  %v481 = vld [vmem:[%s474 + $0x30] sm:$0xff]
  %v482 = vld [vmem:[%s474 + $0x38] sm:$0xff]
  %v483 = vadd.f32 %v466, %v475
  %v484 = vadd.f32 %v467, %v476
  %v485 = vadd.f32 %v468, %v477
  %v486 = vadd.f32 %v469, %v478
  %v487 = vadd.f32 %v470, %v479
  %v488 = vadd.f32 %v471, %v480
  %v489 = vadd.f32 %v472, %v481
  %v490 = vadd.f32 %v473, %v482
  %s491 = scalar_lea.vmem %s7, 64
  %492 = vst [vmem:[%s491] sm:$0xff] %v483
  %493 = vst [vmem:[%s491 + $0x8] sm:$0xff] %v484
  %494 = vst [vmem:[%s491 + $0x10] sm:$0xff] %v485
  %495 = vst [vmem:[%s491 + $0x18] sm:$0xff] %v486
  %496 = vst [vmem:[%s491 + $0x20] sm:$0xff] %v487
  %497 = vst [vmem:[%s491 + $0x28] sm:$0xff] %v488
  %498 = vst [vmem:[%s491 + $0x30] sm:$0xff] %v489
  %499 = vst [vmem:[%s491 + $0x38] sm:$0xff] %v490
  // Predicated region
  $region30: #{context_guided_block.5} parent=0 // pred_check
    _
  $region31: #{context_guided_block.5} parent=0 // pred_check_branch
    %501 = sbr.rel (0) target = $region33
  $region32: #{context_guided_block.5} parent=0 // pred_region
    _
  $region33: #{context_guided_block.5} parent=0 // pred_fallthru
    _
  // Predicated region
  $region34: #{context_guided_block.5} parent=0 // pred_check
    _
  $region35: #{context_guided_block.5} parent=0 // pred_check_branch
    %503 = sbr.rel (0) target = $region37
  $region36: #{context_guided_block.5} parent=0 // pred_region
    _
  $region37: #{context_guided_block.5} parent=0 // pred_fallthru
    _

// kernel: context_guided_block.4
$region0: #{context_guided_block.4}
  #allocation0 [shape = 'u32[]', space=smem, size = 0x4, offset = 0x4, fixed_abs, tag = 'smem constant byte address 0x4 - core index']
  #allocation1 [shape = 'u32[72,128]{1,0:T(1,128)}', space=vmem, size = 0x9000, scoped, tag = 'internal scratch']
  %s0 = inlined_call_operand.vmem [shape: f32[2,16,256], index: 0, kind: input, shape index: {}]
  %s1 = inlined_call_operand.vmem [shape: f32[16,3], index: 1, kind: input, shape index: {}]
  %s2 = inlined_call_operand.vmem [shape: f32[16,18], index: 2, kind: input, shape index: {}]
  %s3 = inlined_call_operand.vmem [shape: s32[2,256], index: 3, kind: input, shape index: {}]
  %s4 = inlined_call_operand.vmem [shape: f32[2,32,256], index: 4, kind: output, shape index: {0}]
  %s5 = inlined_call_operand.vmem [shape: f32[1,16,4], index: 5, kind: output, shape index: {1}]
  %6 = xla_tuple %s4, %s5
  %s7 = sld [smem:[#allocation0]]
  $region34: #{context_guided_block.4} parent=0
    _
  %s9 = ssub.s32 1, %s7
  %s10 = scalar_select 0, %s9, %s7
  // Predicated region
  $region2: #{context_guided_block.4} parent=0 // pred_check
    _
  $region3: #{context_guided_block.4} parent=0 // pred_check_branch
    %12 = sbr.rel (0) target = $region5
  $region4: #{context_guided_block.4} parent=0 // pred_region
    _
  $region5: #{context_guided_block.4} parent=0 // pred_fallthru
    _
  // Predicated region
  $region6: #{context_guided_block.4} parent=0 // pred_check
    _
  $region7: #{context_guided_block.4} parent=0 // pred_check_branch
    %14 = sbr.rel (0) target = $region9
  $region8: #{context_guided_block.4} parent=0 // pred_region
    _
  $region9: #{context_guided_block.4} parent=0 // pred_fallthru
    _
  // Predicated region
  $region10: #{context_guided_block.4} parent=0 // pred_check
    _
  $region11: #{context_guided_block.4} parent=0 // pred_check_branch
    %16 = sbr.rel (0) target = $region13
  $region12: #{context_guided_block.4} parent=0 // pred_region
    _
  $region13: #{context_guided_block.4} parent=0 // pred_fallthru
    _
  // Predicated region
  $region14: #{context_guided_block.4} parent=0 // pred_check
    _
  $region15: #{context_guided_block.4} parent=0 // pred_check_branch
    %18 = sbr.rel (0) target = $region17
  $region16: #{context_guided_block.4} parent=0 // pred_region
    _
  $region17: #{context_guided_block.4} parent=0 // pred_fallthru
    _
  %v19 = vld [vmem:[%s1] sm:$0xff]
  %v20 = vld [vmem:[%s1 + $0x8] sm:$0xff]
  %v21 = vld [vmem:[%s2] sm:$0xff]
  %v22 = vld [vmem:[%s2 + $0x8] sm:$0xff]
  %v23 = vld [vmem:[%s3] ss:$2 sm:$0x3]
  %s24 = scalar_lea.vmem %s3, 1
  %v25 = vld [vmem:[%s24] ss:$2 sm:$0x3]
  %vm26 = vcmp.ge.s32.totalorder %v23, 1
  %vm27 = vcmp.ge.s32.totalorder %v25, 1
  %vm28 = vmand %vm26, %vm27
  %v29 = vsel %vm28, 1, 0
  %v30 = vcvt.s32.f32 %v29
  %v31 = vsel %vm26, 1, 0
  %v32 = vcvt.s32.f32 %v31
  %vm33 = vcmp.lt.s32.totalorder %v25, 15
  %vm34 = vmand %vm26, %vm33
  %v35 = vsel %vm34, 1, 0
  %v36 = vcvt.s32.f32 %v35
  %v37 = vsel %vm27, 1, 0
  %v38 = vcvt.s32.f32 %v37
  %v39 = vsel %vm33, 1, 0
  %v40 = vcvt.s32.f32 %v39
  %vm41 = vcmp.lt.s32.totalorder %v23, 15
  %vm42 = vmand %vm41, %vm27
  %v43 = vsel %vm42, 1, 0
  %v44 = vcvt.s32.f32 %v43
  %v45 = vsel %vm41, 1, 0
  %v46 = vcvt.s32.f32 %v45
  %vm47 = vmand %vm41, %vm33
  %v48 = vsel %vm47, 1, 0
  %v49 = vcvt.s32.f32 %v48
  %vm50 = vcmp.ge.s32.totalorder %v23, 2
  %vm51 = vcmp.ge.s32.totalorder %v25, 2
  %vm52 = vmand %vm50, %vm51
  %v53 = vsel %vm52, 1, 0
  %v54 = vcvt.s32.f32 %v53
  %v55 = vsel %vm50, 1, 0
  %v56 = vcvt.s32.f32 %v55
  %vm57 = vcmp.lt.s32.totalorder %v25, 14
  %vm58 = vmand %vm50, %vm57
  %v59 = vsel %vm58, 1, 0
  %v60 = vcvt.s32.f32 %v59
  %v61 = vsel %vm51, 1, 0
  %v62 = vcvt.s32.f32 %v61
  %v63 = vsel %vm57, 1, 0
  %v64 = vcvt.s32.f32 %v63
  %vm65 = vcmp.lt.s32.totalorder %v23, 14
  %vm66 = vmand %vm65, %vm51
  %v67 = vsel %vm66, 1, 0
  %v68 = vcvt.s32.f32 %v67
  %v69 = vsel %vm65, 1, 0
  %v70 = vcvt.s32.f32 %v69
  %vm71 = vmand %vm65, %vm57
  %v72 = vsel %vm71, 1, 0
  %v73 = vcvt.s32.f32 %v72
  %v74 = vld [vmem:[%s0] sm:$0xff]
  %v75 = vld [vmem:[%s0 + $0x8] sm:$0xff]
  %v76 = vld [vmem:[%s0 + $0x10] sm:$0xff]
  %v77 = vld [vmem:[%s0 + $0x18] sm:$0xff]
  %79 = vset.pattern.permute.xlu0 0
  %80 = vperm.xlu0 %79, %v19
  %v81 = vpop.permute.xlu0 %80
  %84 = vset.pattern.permute.xlu0 0
  %85 = vperm.xlu0 %84, %v20
  %v86 = vpop.permute.xlu0 %85
  %v88 = vmul.f32 %v74, %v81
  %v89 = vmul.f32 %v75, %v81
  %v90 = vmul.f32 %v76, %v86
  %v91 = vmul.f32 %v77, %v86
  %92 = vset.pattern.permute.xlu0 1
  %93 = vperm.xlu0 %92, %v19
  %v94 = vpop.permute.xlu0 %93
  %96 = vset.pattern.permute.xlu0 1
  %97 = vperm.xlu0 %96, %v20
  %v98 = vpop.permute.xlu0 %97
  %v100 = vadd.f32 %v88, %v94
  %v101 = vadd.f32 %v89, %v94
  %v102 = vadd.f32 %v90, %v98
  %v103 = vadd.f32 %v91, %v98
  %vm104 = vcmp.gt.f32.partialorder %v100, 0.0
  %vm105 = vcmp.gt.f32.partialorder %v101, 0.0
  %vm106 = vcmp.gt.f32.partialorder %v102, 0.0
  %vm107 = vcmp.gt.f32.partialorder %v103, 0.0
  %108 = vset.pattern.permute.xlu0 2
  %109 = vperm.xlu0 %108, %v19
  %v110 = vpop.permute.xlu0 %109
  %112 = vset.pattern.permute.xlu0 2
  %113 = vperm.xlu0 %112, %v20
  %v114 = vpop.permute.xlu0 %113
  %v116 = vmul.f32 %v110, %v100
  %v117 = vmul.f32 %v110, %v101
  %v118 = vmul.f32 %v114, %v102
  %v119 = vmul.f32 %v114, %v103
  %v120 = vsel %vm104, %v100, %v116
  %v121 = vsel %vm105, %v101, %v117
  %v122 = vsel %vm106, %v102, %v118
  %v123 = vsel %vm107, %v103, %v119
  %125 = vset.pattern.permute.xlu0 4
  %126 = vperm.xlu0 %125, %v21
  %v127 = vpop.permute.xlu0 %126
  %130 = vset.pattern.permute.xlu0 4
  %131 = vperm.xlu0 %130, %v22
  %v132 = vpop.permute.xlu0 %131
  %v134 = vmul.f32 %v120, %v127
  %v135 = vmul.f32 %v121, %v127
  %v136 = vmul.f32 %v122, %v132
  %v137 = vmul.f32 %v123, %v132
  %138 = vrot.lane.b32.xlu0 %v120, 17
  %v139 = vpop.permute.xlu0 %138
  %140 = vrot.lane.b32.xlu0 %v122, 17
  %v141 = vpop.permute.xlu0 %140
  %142 = vrot.lane.b32.xlu0 %v121, 17
  %v143 = vpop.permute.xlu0 %142
  %144 = vrot.lane.b32.xlu0 %v123, 17
  %v145 = vpop.permute.xlu0 %144
  %v146 = vlaneseq
  %v147 = vand.u32 %v146, 127
  %vm148 = vcmp.lt.s32.totalorder %v147, 17
  %v149 = vsel %vm148, %v139, %v143
  %v150 = vsel %vm148, %v141, %v145
  %v151 = vsel %vm148, %v143, %v139
  %v152 = vsel %vm148, %v145, %v141
  %v154 = vperm.slane %v30, 0
  %v155 = vperm.slane %v30, 1
  %v158 = vmul.f32 %v151, %v154
  %v159 = vmul.f32 %v149, %v155
  %v160 = vmul.f32 %v152, %v154
  %v161 = vmul.f32 %v150, %v155
  %162 = vset.pattern.permute.xlu0 0
  %163 = vperm.xlu0 %162, %v21
  %v164 = vpop.permute.xlu0 %163
  %166 = vset.pattern.permute.xlu0 0
  %167 = vperm.xlu0 %166, %v22
  %v168 = vpop.permute.xlu0 %167
  %v170 = vmul.f32 %v158, %v164
  %v171 = vmul.f32 %v159, %v164
  %v172 = vmul.f32 %v160, %v168
  %v173 = vmul.f32 %v161, %v168
  %v174 = vadd.f32 %v134, %v170
  %v175 = vadd.f32 %v135, %v171
  %v176 = vadd.f32 %v136, %v172
  %v177 = vadd.f32 %v137, %v173
  %178 = vrot.lane.b32.xlu0 %v120, 16
  %v179 = vpop.permute.xlu0 %178
  %180 = vrot.lane.b32.xlu0 %v122, 16
  %v181 = vpop.permute.xlu0 %180
  %182 = vrot.lane.b32.xlu0 %v121, 16
  %v183 = vpop.permute.xlu0 %182
  %184 = vrot.lane.b32.xlu0 %v123, 16
  %v185 = vpop.permute.xlu0 %184
  %vm186 = vcmp.lt.s32.totalorder %v147, 16
  %v187 = vsel %vm186, %v179, %v183
  %v188 = vsel %vm186, %v181, %v185
  %v189 = vsel %vm186, %v183, %v179
  %v190 = vsel %vm186, %v185, %v181
  %v192 = vperm.slane %v32, 0
  %v193 = vperm.slane %v32, 1
  %v196 = vmul.f32 %v189, %v192
  %v197 = vmul.f32 %v187, %v193
  %v198 = vmul.f32 %v190, %v192
  %v199 = vmul.f32 %v188, %v193
  %200 = vset.pattern.permute.xlu0 1
  %201 = vperm.xlu0 %200, %v21
  %v202 = vpop.permute.xlu0 %201
  %204 = vset.pattern.permute.xlu0 1
  %205 = vperm.xlu0 %204, %v22
  %v206 = vpop.permute.xlu0 %205
  %v208 = vmul.f32 %v196, %v202
  %v209 = vmul.f32 %v197, %v202
  %v210 = vmul.f32 %v198, %v206
  %v211 = vmul.f32 %v199, %v206
  %v212 = vadd.f32 %v174, %v208
  %v213 = vadd.f32 %v175, %v209
  %v214 = vadd.f32 %v176, %v210
  %v215 = vadd.f32 %v177, %v211
  %216 = vrot.lane.b32.xlu0 %v120, 15
  %v217 = vpop.permute.xlu0 %216
  %218 = vrot.lane.b32.xlu0 %v122, 15
  %v219 = vpop.permute.xlu0 %218
  %220 = vrot.lane.b32.xlu0 %v121, 15
  %v221 = vpop.permute.xlu0 %220
  %222 = vrot.lane.b32.xlu0 %v123, 15
  %v223 = vpop.permute.xlu0 %222
  %vm224 = vcmp.lt.s32.totalorder %v147, 15
  %v225 = vsel %vm224, %v217, %v221
  %v226 = vsel %vm224, %v219, %v223
  %v227 = vsel %vm224, %v221, %v217
  %v228 = vsel %vm224, %v223, %v219
  %v230 = vperm.slane %v36, 0
  %v231 = vperm.slane %v36, 1
  %v234 = vmul.f32 %v227, %v230
  %v235 = vmul.f32 %v225, %v231
  %v236 = vmul.f32 %v228, %v230
  %v237 = vmul.f32 %v226, %v231
  %238 = vset.pattern.permute.xlu0 2
  %239 = vperm.xlu0 %238, %v21
  %v240 = vpop.permute.xlu0 %239
  %242 = vset.pattern.permute.xlu0 2
  %243 = vperm.xlu0 %242, %v22
  %v244 = vpop.permute.xlu0 %243
  %v246 = vmul.f32 %v234, %v240
  %v247 = vmul.f32 %v235, %v240
  %v248 = vmul.f32 %v236, %v244
  %v249 = vmul.f32 %v237, %v244
  %v250 = vadd.f32 %v212, %v246
  %v251 = vadd.f32 %v213, %v247
  %v252 = vadd.f32 %v214, %v248
  %v253 = vadd.f32 %v215, %v249
  %254 = vrot.lane.b32.xlu0 %v120, 1
  %v255 = vpop.permute.xlu0 %254
  %256 = vrot.lane.b32.xlu0 %v122, 1
  %v257 = vpop.permute.xlu0 %256
  %258 = vrot.lane.b32.xlu0 %v121, 1
  %v259 = vpop.permute.xlu0 %258
  %260 = vrot.lane.b32.xlu0 %v123, 1
  %v261 = vpop.permute.xlu0 %260
  %vm262 = vcmp.lt.s32.totalorder %v147, 1
  %v263 = vsel %vm262, %v255, %v259
  %v264 = vsel %vm262, %v257, %v261
  %v265 = vsel %vm262, %v259, %v255
  %v266 = vsel %vm262, %v261, %v257
  %v268 = vperm.slane %v38, 0
  %v269 = vperm.slane %v38, 1
  %v272 = vmul.f32 %v265, %v268
  %v273 = vmul.f32 %v263, %v269
  %v274 = vmul.f32 %v266, %v268
  %v275 = vmul.f32 %v264, %v269
  %276 = vset.pattern.permute.xlu0 3
  %277 = vperm.xlu0 %276, %v21
  %v278 = vpop.permute.xlu0 %277
  %280 = vset.pattern.permute.xlu0 3
  %281 = vperm.xlu0 %280, %v22
  %v282 = vpop.permute.xlu0 %281
  %v284 = vmul.f32 %v272, %v278
  %v285 = vmul.f32 %v273, %v278
  %v286 = vmul.f32 %v274, %v282
  %v287 = vmul.f32 %v275, %v282
  %v288 = vadd.f32 %v250, %v284
  %v289 = vadd.f32 %v251, %v285
  %v290 = vadd.f32 %v252, %v286
  %v291 = vadd.f32 %v253, %v287
  %292 = vrot.lane.b32.xlu0 %v120, 127
  %v293 = vpop.permute.xlu0 %292
  %294 = vrot.lane.b32.xlu0 %v122, 127
  %v295 = vpop.permute.xlu0 %294
  %296 = vrot.lane.b32.xlu0 %v121, 127
  %v297 = vpop.permute.xlu0 %296
  %298 = vrot.lane.b32.xlu0 %v123, 127
  %v299 = vpop.permute.xlu0 %298
  %vm300 = vcmp.lt.s32.totalorder %v147, 127
  %v301 = vsel %vm300, %v293, %v297
  %v302 = vsel %vm300, %v295, %v299
  %v303 = vsel %vm300, %v297, %v293
  %v304 = vsel %vm300, %v299, %v295
  %v306 = vperm.slane %v40, 0
  %v307 = vperm.slane %v40, 1
  %v310 = vmul.f32 %v301, %v306
  %v311 = vmul.f32 %v303, %v307
  %v312 = vmul.f32 %v302, %v306
  %v313 = vmul.f32 %v304, %v307
  %314 = vset.pattern.permute.xlu0 5
  %315 = vperm.xlu0 %314, %v21
  %v316 = vpop.permute.xlu0 %315
  %318 = vset.pattern.permute.xlu0 5
  %319 = vperm.xlu0 %318, %v22
  %v320 = vpop.permute.xlu0 %319
  %v322 = vmul.f32 %v310, %v316
  %v323 = vmul.f32 %v311, %v316
  %v324 = vmul.f32 %v312, %v320
  %v325 = vmul.f32 %v313, %v320
  %v326 = vadd.f32 %v288, %v322
  %v327 = vadd.f32 %v289, %v323
  %v328 = vadd.f32 %v290, %v324
  %v329 = vadd.f32 %v291, %v325
  %330 = vrot.lane.b32.xlu0 %v120, 113
  %v331 = vpop.permute.xlu0 %330
  %332 = vrot.lane.b32.xlu0 %v122, 113
  %v333 = vpop.permute.xlu0 %332
  %334 = vrot.lane.b32.xlu0 %v121, 113
  %v335 = vpop.permute.xlu0 %334
  %336 = vrot.lane.b32.xlu0 %v123, 113
  %v337 = vpop.permute.xlu0 %336
  %vm338 = vcmp.lt.s32.totalorder %v147, 113
  %v339 = vsel %vm338, %v331, %v335
  %v340 = vsel %vm338, %v333, %v337
  %v341 = vsel %vm338, %v335, %v331
  %v342 = vsel %vm338, %v337, %v333
  %v344 = vperm.slane %v44, 0
  %v345 = vperm.slane %v44, 1
  %v348 = vmul.f32 %v339, %v344
  %v349 = vmul.f32 %v341, %v345
  %v350 = vmul.f32 %v340, %v344
  %v351 = vmul.f32 %v342, %v345
  %352 = vset.pattern.permute.xlu0 6
  %353 = vperm.xlu0 %352, %v21
  %v354 = vpop.permute.xlu0 %353
  %356 = vset.pattern.permute.xlu0 6
  %357 = vperm.xlu0 %356, %v22
  %v358 = vpop.permute.xlu0 %357
  %v360 = vmul.f32 %v348, %v354
  %v361 = vmul.f32 %v349, %v354
  %v362 = vmul.f32 %v350, %v358
  %v363 = vmul.f32 %v351, %v358
  %v364 = vadd.f32 %v326, %v360
  %v365 = vadd.f32 %v327, %v361
  %v366 = vadd.f32 %v328, %v362
  %v367 = vadd.f32 %v329, %v363
  %368 = vrot.lane.b32.xlu0 %v120, 112
  %v369 = vpop.permute.xlu0 %368
  %370 = vrot.lane.b32.xlu0 %v122, 112
  %v371 = vpop.permute.xlu0 %370
  %372 = vrot.lane.b32.xlu0 %v121, 112
  %v373 = vpop.permute.xlu0 %372
  %374 = vrot.lane.b32.xlu0 %v123, 112
  %v375 = vpop.permute.xlu0 %374
  %vm376 = vcmp.lt.s32.totalorder %v147, 112
  %v377 = vsel %vm376, %v369, %v373
  %v378 = vsel %vm376, %v371, %v375
  %v379 = vsel %vm376, %v373, %v369
  %v380 = vsel %vm376, %v375, %v371
  %v382 = vperm.slane %v46, 0
  %v383 = vperm.slane %v46, 1
  %v386 = vmul.f32 %v377, %v382
  %v387 = vmul.f32 %v379, %v383
  %v388 = vmul.f32 %v378, %v382
  %v389 = vmul.f32 %v380, %v383
  %390 = vset.pattern.permute.xlu0 7
  %391 = vperm.xlu0 %390, %v21
  %v392 = vpop.permute.xlu0 %391
  %394 = vset.pattern.permute.xlu0 7
  %395 = vperm.xlu0 %394, %v22
  %v396 = vpop.permute.xlu0 %395
  %v398 = vmul.f32 %v386, %v392
  %v399 = vmul.f32 %v387, %v392
  %v400 = vmul.f32 %v388, %v396
  %v401 = vmul.f32 %v389, %v396
  %v402 = vadd.f32 %v364, %v398
  %v403 = vadd.f32 %v365, %v399
  %v404 = vadd.f32 %v366, %v400
  %v405 = vadd.f32 %v367, %v401
  %406 = vrot.lane.b32.xlu0 %v120, 111
  %v407 = vpop.permute.xlu0 %406
  %408 = vrot.lane.b32.xlu0 %v122, 111
  %v409 = vpop.permute.xlu0 %408
  %410 = vrot.lane.b32.xlu0 %v121, 111
  %v411 = vpop.permute.xlu0 %410
  %412 = vrot.lane.b32.xlu0 %v123, 111
  %v413 = vpop.permute.xlu0 %412
  %vm414 = vcmp.lt.s32.totalorder %v147, 111
  %v415 = vsel %vm414, %v407, %v411
  %v416 = vsel %vm414, %v409, %v413
  %v417 = vsel %vm414, %v411, %v407
  %v418 = vsel %vm414, %v413, %v409
  %v420 = vperm.slane %v49, 0
  %v421 = vperm.slane %v49, 1
  %v424 = vmul.f32 %v415, %v420
  %v425 = vmul.f32 %v417, %v421
  %v426 = vmul.f32 %v416, %v420
  %v427 = vmul.f32 %v418, %v421
  %428 = vset.pattern.permute.xlu0 8
  %429 = vperm.xlu0 %428, %v21
  %v430 = vpop.permute.xlu0 %429
  %432 = vset.pattern.permute.xlu0 8
  %433 = vperm.xlu0 %432, %v22
  %v434 = vpop.permute.xlu0 %433
  %v436 = vmul.f32 %v424, %v430
  %v437 = vmul.f32 %v425, %v430
  %v438 = vmul.f32 %v426, %v434
  %v439 = vmul.f32 %v427, %v434
  %v440 = vadd.f32 %v402, %v436
  %v441 = vadd.f32 %v403, %v437
  %v442 = vadd.f32 %v404, %v438
  %v443 = vadd.f32 %v405, %v439
  %444 = vset.pattern.permute.xlu0 13
  %445 = vperm.xlu0 %444, %v21
  %v446 = vpop.permute.xlu0 %445
  %448 = vset.pattern.permute.xlu0 13
  %449 = vperm.xlu0 %448, %v22
  %v450 = vpop.permute.xlu0 %449
  %v452 = vmul.f32 %v120, %v446
  %v453 = vmul.f32 %v121, %v446
  %v454 = vmul.f32 %v122, %v450
  %v455 = vmul.f32 %v123, %v450
  %456 = vrot.lane.b32.xlu0 %v120, 34
  %v457 = vpop.permute.xlu0 %456
  %458 = vrot.lane.b32.xlu0 %v122, 34
  %v459 = vpop.permute.xlu0 %458
  %460 = vrot.lane.b32.xlu0 %v121, 34
  %v461 = vpop.permute.xlu0 %460
  %462 = vrot.lane.b32.xlu0 %v123, 34
  %v463 = vpop.permute.xlu0 %462
  %vm464 = vcmp.lt.s32.totalorder %v147, 34
  %v465 = vsel %vm464, %v457, %v461
  %v466 = vsel %vm464, %v459, %v463
  %v467 = vsel %vm464, %v461, %v457
  %v468 = vsel %vm464, %v463, %v459
  %v470 = vperm.slane %v54, 0
  %v471 = vperm.slane %v54, 1
  %v474 = vmul.f32 %v467, %v470
  %v475 = vmul.f32 %v465, %v471
  %v476 = vmul.f32 %v468, %v470
  %v477 = vmul.f32 %v466, %v471
  %478 = vset.pattern.permute.xlu0 9
  %479 = vperm.xlu0 %478, %v21
  %v480 = vpop.permute.xlu0 %479
  %482 = vset.pattern.permute.xlu0 9
  %483 = vperm.xlu0 %482, %v22
  %v484 = vpop.permute.xlu0 %483
  %v486 = vmul.f32 %v474, %v480
  %v487 = vmul.f32 %v475, %v480
  %v488 = vmul.f32 %v476, %v484
  %v489 = vmul.f32 %v477, %v484
  %v490 = vadd.f32 %v452, %v486
  %v491 = vadd.f32 %v453, %v487
  %v492 = vadd.f32 %v454, %v488
  %v493 = vadd.f32 %v455, %v489
  %494 = vrot.lane.b32.xlu0 %v120, 32
  %v495 = vpop.permute.xlu0 %494
  %496 = vrot.lane.b32.xlu0 %v122, 32
  %v497 = vpop.permute.xlu0 %496
  %498 = vrot.lane.b32.xlu0 %v121, 32
  %v499 = vpop.permute.xlu0 %498
  %500 = vrot.lane.b32.xlu0 %v123, 32
  %v501 = vpop.permute.xlu0 %500
  %vm502 = vcmp.lt.s32.totalorder %v147, 32
  %v503 = vsel %vm502, %v495, %v499
  %v504 = vsel %vm502, %v497, %v501
  %v505 = vsel %vm502, %v499, %v495
  %v506 = vsel %vm502, %v501, %v497
  %v508 = vperm.slane %v56, 0
  %v509 = vperm.slane %v56, 1
  %v512 = vmul.f32 %v505, %v508
  %v513 = vmul.f32 %v503, %v509
  %v514 = vmul.f32 %v506, %v508
  %v515 = vmul.f32 %v504, %v509
  %516 = vset.pattern.permute.xlu0 10
  %517 = vperm.xlu0 %516, %v21
  %v518 = vpop.permute.xlu0 %517
  %520 = vset.pattern.permute.xlu0 10
  %521 = vperm.xlu0 %520, %v22
  %v522 = vpop.permute.xlu0 %521
  %v524 = vmul.f32 %v512, %v518
  %v525 = vmul.f32 %v513, %v518
  %v526 = vmul.f32 %v514, %v522
  %v527 = vmul.f32 %v515, %v522
  %v528 = vadd.f32 %v490, %v524
  %v529 = vadd.f32 %v491, %v525
  %v530 = vadd.f32 %v492, %v526
  %v531 = vadd.f32 %v493, %v527
  %532 = vrot.lane.b32.xlu0 %v120, 30
  %v533 = vpop.permute.xlu0 %532
  %534 = vrot.lane.b32.xlu0 %v122, 30
  %v535 = vpop.permute.xlu0 %534
  %536 = vrot.lane.b32.xlu0 %v121, 30
  %v537 = vpop.permute.xlu0 %536
  %538 = vrot.lane.b32.xlu0 %v123, 30
  %v539 = vpop.permute.xlu0 %538
  %vm540 = vcmp.lt.s32.totalorder %v147, 30
  %v541 = vsel %vm540, %v533, %v537
  %v542 = vsel %vm540, %v535, %v539
  %v543 = vsel %vm540, %v537, %v533
  %v544 = vsel %vm540, %v539, %v535
  %v546 = vperm.slane %v60, 0
  %v547 = vperm.slane %v60, 1
  %v550 = vmul.f32 %v543, %v546
  %v551 = vmul.f32 %v541, %v547
  %v552 = vmul.f32 %v544, %v546
  %v553 = vmul.f32 %v542, %v547
  %554 = vset.pattern.permute.xlu0 11
  %555 = vperm.xlu0 %554, %v21
  %v556 = vpop.permute.xlu0 %555
  %558 = vset.pattern.permute.xlu0 11
  %559 = vperm.xlu0 %558, %v22
  %v560 = vpop.permute.xlu0 %559
  %v562 = vmul.f32 %v550, %v556
  %v563 = vmul.f32 %v551, %v556
  %v564 = vmul.f32 %v552, %v560
  %v565 = vmul.f32 %v553, %v560
  %v566 = vadd.f32 %v528, %v562
  %v567 = vadd.f32 %v529, %v563
  %v568 = vadd.f32 %v530, %v564
  %v569 = vadd.f32 %v531, %v565
  %570 = vrot.lane.b32.xlu0 %v120, 2
  %v571 = vpop.permute.xlu0 %570
  %572 = vrot.lane.b32.xlu0 %v122, 2
  %v573 = vpop.permute.xlu0 %572
  %574 = vrot.lane.b32.xlu0 %v121, 2
  %v575 = vpop.permute.xlu0 %574
  %576 = vrot.lane.b32.xlu0 %v123, 2
  %v577 = vpop.permute.xlu0 %576
  %vm578 = vcmp.lt.s32.totalorder %v147, 2
  %v579 = vsel %vm578, %v571, %v575
  %v580 = vsel %vm578, %v573, %v577
  %v581 = vsel %vm578, %v575, %v571
  %v582 = vsel %vm578, %v577, %v573
  %v584 = vperm.slane %v62, 0
  %v585 = vperm.slane %v62, 1
  %v588 = vmul.f32 %v581, %v584
  %v589 = vmul.f32 %v579, %v585
  %v590 = vmul.f32 %v582, %v584
  %v591 = vmul.f32 %v580, %v585
  %592 = vset.pattern.permute.xlu0 12
  %593 = vperm.xlu0 %592, %v21
  %v594 = vpop.permute.xlu0 %593
  %596 = vset.pattern.permute.xlu0 12
  %597 = vperm.xlu0 %596, %v22
  %v598 = vpop.permute.xlu0 %597
  %v600 = vmul.f32 %v588, %v594
  %v601 = vmul.f32 %v589, %v594
  %v602 = vmul.f32 %v590, %v598
  %v603 = vmul.f32 %v591, %v598
  %v604 = vadd.f32 %v566, %v600
  %v605 = vadd.f32 %v567, %v601
  %v606 = vadd.f32 %v568, %v602
  %v607 = vadd.f32 %v569, %v603
  %608 = vrot.lane.b32.xlu0 %v120, 126
  %v609 = vpop.permute.xlu0 %608
  %610 = vrot.lane.b32.xlu0 %v122, 126
  %v611 = vpop.permute.xlu0 %610
  %612 = vrot.lane.b32.xlu0 %v121, 126
  %v613 = vpop.permute.xlu0 %612
  %614 = vrot.lane.b32.xlu0 %v123, 126
  %v615 = vpop.permute.xlu0 %614
  %vm616 = vcmp.lt.s32.totalorder %v147, 126
  %v617 = vsel %vm616, %v609, %v613
  %v618 = vsel %vm616, %v611, %v615
  %v619 = vsel %vm616, %v613, %v609
  %v620 = vsel %vm616, %v615, %v611
  %v622 = vperm.slane %v64, 0
  %v623 = vperm.slane %v64, 1
  %v626 = vmul.f32 %v617, %v622
  %v627 = vmul.f32 %v619, %v623
  %v628 = vmul.f32 %v618, %v622
  %v629 = vmul.f32 %v620, %v623
  %630 = vset.pattern.permute.xlu0 14
  %631 = vperm.xlu0 %630, %v21
  %v632 = vpop.permute.xlu0 %631
  %634 = vset.pattern.permute.xlu0 14
  %635 = vperm.xlu0 %634, %v22
  %v636 = vpop.permute.xlu0 %635
  %v638 = vmul.f32 %v626, %v632
  %v639 = vmul.f32 %v627, %v632
  %v640 = vmul.f32 %v628, %v636
  %v641 = vmul.f32 %v629, %v636
  %v642 = vadd.f32 %v604, %v638
  %v643 = vadd.f32 %v605, %v639
  %v644 = vadd.f32 %v606, %v640
  %v645 = vadd.f32 %v607, %v641
  %646 = vrot.lane.b32.xlu0 %v120, 98
  %v647 = vpop.permute.xlu0 %646
  %648 = vrot.lane.b32.xlu0 %v122, 98
  %v649 = vpop.permute.xlu0 %648
  %650 = vrot.lane.b32.xlu0 %v121, 98
  %v651 = vpop.permute.xlu0 %650
  %652 = vrot.lane.b32.xlu0 %v123, 98
  %v653 = vpop.permute.xlu0 %652
  %vm654 = vcmp.lt.s32.totalorder %v147, 98
  %v655 = vsel %vm654, %v647, %v651
  %v656 = vsel %vm654, %v649, %v653
  %v657 = vsel %vm654, %v651, %v647
  %v658 = vsel %vm654, %v653, %v649
  %v660 = vperm.slane %v68, 0
  %v661 = vperm.slane %v68, 1
  %v664 = vmul.f32 %v655, %v660
  %v665 = vmul.f32 %v657, %v661
  %v666 = vmul.f32 %v656, %v660
  %v667 = vmul.f32 %v658, %v661
  %668 = vset.pattern.permute.xlu0 15
  %669 = vperm.xlu0 %668, %v21
  %v670 = vpop.permute.xlu0 %669
  %672 = vset.pattern.permute.xlu0 15
  %673 = vperm.xlu0 %672, %v22
  %v674 = vpop.permute.xlu0 %673
  %v676 = vmul.f32 %v664, %v670
  %v677 = vmul.f32 %v665, %v670
  %v678 = vmul.f32 %v666, %v674
  %v679 = vmul.f32 %v667, %v674
  %v680 = vadd.f32 %v642, %v676
  %v681 = vadd.f32 %v643, %v677
  %v682 = vadd.f32 %v644, %v678
  %v683 = vadd.f32 %v645, %v679
  %684 = vrot.lane.b32.xlu0 %v120, 96
  %v685 = vpop.permute.xlu0 %684
  %686 = vrot.lane.b32.xlu0 %v122, 96
  %v687 = vpop.permute.xlu0 %686
  %688 = vrot.lane.b32.xlu0 %v121, 96
  %v689 = vpop.permute.xlu0 %688
  %690 = vrot.lane.b32.xlu0 %v123, 96
  %v691 = vpop.permute.xlu0 %690
  %vm692 = vcmp.lt.s32.totalorder %v147, 96
  %v693 = vsel %vm692, %v685, %v689
  %v694 = vsel %vm692, %v687, %v691
  %v695 = vsel %vm692, %v689, %v685
  %v696 = vsel %vm692, %v691, %v687
  %v698 = vperm.slane %v70, 0
  %v699 = vperm.slane %v70, 1
  %v702 = vmul.f32 %v693, %v698
  %v703 = vmul.f32 %v695, %v699
  %v704 = vmul.f32 %v694, %v698
  %v705 = vmul.f32 %v696, %v699
  %706 = vset.pattern.permute.xlu0 16
  %707 = vperm.xlu0 %706, %v21
  %v708 = vpop.permute.xlu0 %707
  %710 = vset.pattern.permute.xlu0 16
  %711 = vperm.xlu0 %710, %v22
  %v712 = vpop.permute.xlu0 %711
  %v714 = vmul.f32 %v702, %v708
  %v715 = vmul.f32 %v703, %v708
  %v716 = vmul.f32 %v704, %v712
  %v717 = vmul.f32 %v705, %v712
  %v718 = vadd.f32 %v680, %v714
  %v719 = vadd.f32 %v681, %v715
  %v720 = vadd.f32 %v682, %v716
  %v721 = vadd.f32 %v683, %v717
  %722 = vrot.lane.b32.xlu0 %v120, 94
  %v723 = vpop.permute.xlu0 %722
  %724 = vrot.lane.b32.xlu0 %v122, 94
  %v725 = vpop.permute.xlu0 %724
  %726 = vrot.lane.b32.xlu0 %v121, 94
  %v727 = vpop.permute.xlu0 %726
  %728 = vrot.lane.b32.xlu0 %v123, 94
  %v729 = vpop.permute.xlu0 %728
  %vm730 = vcmp.lt.s32.totalorder %v147, 94
  %v731 = vsel %vm730, %v723, %v727
  %v732 = vsel %vm730, %v725, %v729
  %v733 = vsel %vm730, %v727, %v723
  %v734 = vsel %vm730, %v729, %v725
  %v736 = vperm.slane %v73, 0
  %v737 = vperm.slane %v73, 1
  %v740 = vmul.f32 %v731, %v736
  %v741 = vmul.f32 %v733, %v737
  %v742 = vmul.f32 %v732, %v736
  %v743 = vmul.f32 %v734, %v737
  %744 = vset.pattern.permute.xlu0 17
  %745 = vperm.xlu0 %744, %v21
  %v746 = vpop.permute.xlu0 %745
  %748 = vset.pattern.permute.xlu0 17
  %749 = vperm.xlu0 %748, %v22
  %v750 = vpop.permute.xlu0 %749
  %v752 = vmul.f32 %v740, %v746
  %v753 = vmul.f32 %v741, %v746
  %v754 = vmul.f32 %v742, %v750
  %v755 = vmul.f32 %v743, %v750
  %v756 = vadd.f32 %v718, %v752
  %v757 = vadd.f32 %v719, %v753
  %v758 = vadd.f32 %v720, %v754
  %v759 = vadd.f32 %v721, %v755
  %760 = vst [vmem:[%s4] sm:$0xff] %v440
  %761 = vst [vmem:[%s4 + $0x8] sm:$0xff] %v441
  %762 = vst [vmem:[%s4 + $0x10] sm:$0xff] %v442
  %763 = vst [vmem:[%s4 + $0x18] sm:$0xff] %v443
  %764 = vst [vmem:[%s4 + $0x20] sm:$0xff] %v756
  %765 = vst [vmem:[%s4 + $0x28] sm:$0xff] %v757
  %766 = vst [vmem:[%s4 + $0x30] sm:$0xff] %v758
  %767 = vst [vmem:[%s4 + $0x38] sm:$0xff] %v759
  %v768 = vadd.f32 %v440, %v441
  %769 = vadd.xlane.f32.xlu0 %v768
  %v770 = vpop.xlane.xlu0 %769
  %v771 = vadd.f32 %v442, %v443
  %772 = vadd.xlane.f32.xlu0 %v771
  %v773 = vpop.xlane.xlu0 %772
  %v774 = vadd.f32 %v770, 0.0
  %v775 = vadd.f32 %v773, 0.0
  %v776 = vmul.f32 %v440, %v440
  %v777 = vmul.f32 %v441, %v441
  %v778 = vmul.f32 %v442, %v442
  %v779 = vmul.f32 %v443, %v443
  %v780 = vadd.f32 %v776, %v777
  %781 = vadd.xlane.f32.xlu0 %v780
  %v782 = vpop.xlane.xlu0 %781
  %v783 = vadd.f32 %v778, %v779
  %784 = vadd.xlane.f32.xlu0 %v783
  %v785 = vpop.xlane.xlu0 %784
  %v786 = vadd.f32 %v782, 0.0
  %v787 = vadd.f32 %v785, 0.0
  %v788 = vadd.f32 %v756, %v757
  %789 = vadd.xlane.f32.xlu0 %v788
  %v790 = vpop.xlane.xlu0 %789
  %v791 = vadd.f32 %v758, %v759
  %792 = vadd.xlane.f32.xlu0 %v791
  %v793 = vpop.xlane.xlu0 %792
  %v794 = vadd.f32 %v790, 0.0
  %v795 = vadd.f32 %v793, 0.0
  %v796 = vmul.f32 %v756, %v756
  %v797 = vmul.f32 %v757, %v757
  %v798 = vmul.f32 %v758, %v758
  %v799 = vmul.f32 %v759, %v759
  %v800 = vadd.f32 %v796, %v797
  %801 = vadd.xlane.f32.xlu0 %v800
  %v802 = vpop.xlane.xlu0 %801
  %v803 = vadd.f32 %v798, %v799
  %804 = vadd.xlane.f32.xlu0 %v803
  %v805 = vpop.xlane.xlu0 %804
  %v806 = vadd.f32 %v802, 0.0
  %v807 = vadd.f32 %v805, 0.0
  %s808 = scalar_lea.vmem %s0, 32
  %v809 = vld [vmem:[%s808] sm:$0xff]
  %v810 = vld [vmem:[%s808 + $0x8] sm:$0xff]
  %v811 = vld [vmem:[%s808 + $0x10] sm:$0xff]
  %v812 = vld [vmem:[%s808 + $0x18] sm:$0xff]
  %v813 = vmul.f32 %v809, %v81
  %v814 = vmul.f32 %v810, %v81
  %v815 = vmul.f32 %v811, %v86
  %v816 = vmul.f32 %v812, %v86
  %v817 = vadd.f32 %v813, %v94
  %v818 = vadd.f32 %v814, %v94
  %v819 = vadd.f32 %v815, %v98
  %v820 = vadd.f32 %v816, %v98
  %vm821 = vcmp.gt.f32.partialorder %v817, 0.0
  %vm822 = vcmp.gt.f32.partialorder %v818, 0.0
  %vm823 = vcmp.gt.f32.partialorder %v819, 0.0
  %vm824 = vcmp.gt.f32.partialorder %v820, 0.0
  %v825 = vmul.f32 %v110, %v817
  %v826 = vmul.f32 %v110, %v818
  %v827 = vmul.f32 %v114, %v819
  %v828 = vmul.f32 %v114, %v820
  %v829 = vsel %vm821, %v817, %v825
  %v830 = vsel %vm822, %v818, %v826
  %v831 = vsel %vm823, %v819, %v827
  %v832 = vsel %vm824, %v820, %v828
  %v833 = vmul.f32 %v829, %v127
  %v834 = vmul.f32 %v830, %v127
  %v835 = vmul.f32 %v831, %v132
  %v836 = vmul.f32 %v832, %v132
  %837 = vrot.lane.b32.xlu0 %v829, 17
  %v838 = vpop.permute.xlu0 %837
  %839 = vrot.lane.b32.xlu0 %v831, 17
  %v840 = vpop.permute.xlu0 %839
  %841 = vrot.lane.b32.xlu0 %v830, 17
  %v842 = vpop.permute.xlu0 %841
  %843 = vrot.lane.b32.xlu0 %v832, 17
  %v844 = vpop.permute.xlu0 %843
  %v845 = vsel %vm148, %v838, %v842
  %v846 = vsel %vm148, %v840, %v844
  %v847 = vsel %vm148, %v842, %v838
  %v848 = vsel %vm148, %v844, %v840
  %v849 = vmul.f32 %v847, %v154
  %v850 = vmul.f32 %v845, %v155
  %v851 = vmul.f32 %v848, %v154
  %v852 = vmul.f32 %v846, %v155
  %v853 = vmul.f32 %v849, %v164
  %v854 = vmul.f32 %v850, %v164
  %v855 = vmul.f32 %v851, %v168
  %v856 = vmul.f32 %v852, %v168
  %v857 = vadd.f32 %v833, %v853
  %v858 = vadd.f32 %v834, %v854
  %v859 = vadd.f32 %v835, %v855
  %v860 = vadd.f32 %v836, %v856
  %861 = vrot.lane.b32.xlu0 %v829, 16
  %v862 = vpop.permute.xlu0 %861
  %863 = vrot.lane.b32.xlu0 %v831, 16
  %v864 = vpop.permute.xlu0 %863
  %865 = vrot.lane.b32.xlu0 %v830, 16
  %v866 = vpop.permute.xlu0 %865
  %867 = vrot.lane.b32.xlu0 %v832, 16
  %v868 = vpop.permute.xlu0 %867
  %v869 = vsel %vm186, %v862, %v866
  %v870 = vsel %vm186, %v864, %v868
  %v871 = vsel %vm186, %v866, %v862
  %v872 = vsel %vm186, %v868, %v864
  %v873 = vmul.f32 %v871, %v192
  %v874 = vmul.f32 %v869, %v193
  %v875 = vmul.f32 %v872, %v192
  %v876 = vmul.f32 %v870, %v193
  %v877 = vmul.f32 %v873, %v202
  %v878 = vmul.f32 %v874, %v202
  %v879 = vmul.f32 %v875, %v206
  %v880 = vmul.f32 %v876, %v206
  %v881 = vadd.f32 %v857, %v877
  %v882 = vadd.f32 %v858, %v878
  %v883 = vadd.f32 %v859, %v879
  %v884 = vadd.f32 %v860, %v880
  %885 = vrot.lane.b32.xlu0 %v829, 15
  %v886 = vpop.permute.xlu0 %885
  %887 = vrot.lane.b32.xlu0 %v831, 15
  %v888 = vpop.permute.xlu0 %887
  %889 = vrot.lane.b32.xlu0 %v830, 15
  %v890 = vpop.permute.xlu0 %889
  %891 = vrot.lane.b32.xlu0 %v832, 15
  %v892 = vpop.permute.xlu0 %891
  %v893 = vsel %vm224, %v886, %v890
  %v894 = vsel %vm224, %v888, %v892
  %v895 = vsel %vm224, %v890, %v886
  %v896 = vsel %vm224, %v892, %v888
  %v897 = vmul.f32 %v895, %v230
  %v898 = vmul.f32 %v893, %v231
  %v899 = vmul.f32 %v896, %v230
  %v900 = vmul.f32 %v894, %v231
  %v901 = vmul.f32 %v897, %v240
  %v902 = vmul.f32 %v898, %v240
  %v903 = vmul.f32 %v899, %v244
  %v904 = vmul.f32 %v900, %v244
  %v905 = vadd.f32 %v881, %v901
  %v906 = vadd.f32 %v882, %v902
  %v907 = vadd.f32 %v883, %v903
  %v908 = vadd.f32 %v884, %v904
  %909 = vrot.lane.b32.xlu0 %v829, 1
  %v910 = vpop.permute.xlu0 %909
  %911 = vrot.lane.b32.xlu0 %v831, 1
  %v912 = vpop.permute.xlu0 %911
  %913 = vrot.lane.b32.xlu0 %v830, 1
  %v914 = vpop.permute.xlu0 %913
  %915 = vrot.lane.b32.xlu0 %v832, 1
  %v916 = vpop.permute.xlu0 %915
  %v917 = vsel %vm262, %v910, %v914
  %v918 = vsel %vm262, %v912, %v916
  %v919 = vsel %vm262, %v914, %v910
  %v920 = vsel %vm262, %v916, %v912
  %v921 = vmul.f32 %v919, %v268
  %v922 = vmul.f32 %v917, %v269
  %v923 = vmul.f32 %v920, %v268
  %v924 = vmul.f32 %v918, %v269
  %v925 = vmul.f32 %v921, %v278
  %v926 = vmul.f32 %v922, %v278
  %v927 = vmul.f32 %v923, %v282
  %v928 = vmul.f32 %v924, %v282
  %v929 = vadd.f32 %v905, %v925
  %v930 = vadd.f32 %v906, %v926
  %v931 = vadd.f32 %v907, %v927
  %v932 = vadd.f32 %v908, %v928
  %933 = vrot.lane.b32.xlu0 %v829, 127
  %v934 = vpop.permute.xlu0 %933
  %935 = vrot.lane.b32.xlu0 %v831, 127
  %v936 = vpop.permute.xlu0 %935
  %937 = vrot.lane.b32.xlu0 %v830, 127
  %v938 = vpop.permute.xlu0 %937
  %939 = vrot.lane.b32.xlu0 %v832, 127
  %v940 = vpop.permute.xlu0 %939
  %v941 = vsel %vm300, %v934, %v938
  %v942 = vsel %vm300, %v936, %v940
  %v943 = vsel %vm300, %v938, %v934
  %v944 = vsel %vm300, %v940, %v936
  %v945 = vmul.f32 %v941, %v306
  %v946 = vmul.f32 %v943, %v307
  %v947 = vmul.f32 %v942, %v306
  %v948 = vmul.f32 %v944, %v307
  %v949 = vmul.f32 %v945, %v316
  %v950 = vmul.f32 %v946, %v316
  %v951 = vmul.f32 %v947, %v320
  %v952 = vmul.f32 %v948, %v320
  %v953 = vadd.f32 %v929, %v949
  %v954 = vadd.f32 %v930, %v950
  %v955 = vadd.f32 %v931, %v951
  %v956 = vadd.f32 %v932, %v952
  %957 = vrot.lane.b32.xlu0 %v829, 113
  %v958 = vpop.permute.xlu0 %957
  %959 = vrot.lane.b32.xlu0 %v831, 113
  %v960 = vpop.permute.xlu0 %959
  %961 = vrot.lane.b32.xlu0 %v830, 113
  %v962 = vpop.permute.xlu0 %961
  %963 = vrot.lane.b32.xlu0 %v832, 113
  %v964 = vpop.permute.xlu0 %963
  %v965 = vsel %vm338, %v958, %v962
  %v966 = vsel %vm338, %v960, %v964
  %v967 = vsel %vm338, %v962, %v958
  %v968 = vsel %vm338, %v964, %v960
  %v969 = vmul.f32 %v965, %v344
  %v970 = vmul.f32 %v967, %v345
  %v971 = vmul.f32 %v966, %v344
  %v972 = vmul.f32 %v968, %v345
  %v973 = vmul.f32 %v969, %v354
  %v974 = vmul.f32 %v970, %v354
  %v975 = vmul.f32 %v971, %v358
  %v976 = vmul.f32 %v972, %v358
  %v977 = vadd.f32 %v953, %v973
  %v978 = vadd.f32 %v954, %v974
  %v979 = vadd.f32 %v955, %v975
  %v980 = vadd.f32 %v956, %v976
  %981 = vrot.lane.b32.xlu0 %v829, 112
  %v982 = vpop.permute.xlu0 %981
  %983 = vrot.lane.b32.xlu0 %v831, 112
  %v984 = vpop.permute.xlu0 %983
  %985 = vrot.lane.b32.xlu0 %v830, 112
  %v986 = vpop.permute.xlu0 %985
  %987 = vrot.lane.b32.xlu0 %v832, 112
  %v988 = vpop.permute.xlu0 %987
  %v989 = vsel %vm376, %v982, %v986
  %v990 = vsel %vm376, %v984, %v988
  %v991 = vsel %vm376, %v986, %v982
  %v992 = vsel %vm376, %v988, %v984
  %v993 = vmul.f32 %v989, %v382
  %v994 = vmul.f32 %v991, %v383
  %v995 = vmul.f32 %v990, %v382
  %v996 = vmul.f32 %v992, %v383
  %v997 = vmul.f32 %v993, %v392
  %v998 = vmul.f32 %v994, %v392
  %v999 = vmul.f32 %v995, %v396
  %v1000 = vmul.f32 %v996, %v396
  %v1001 = vadd.f32 %v977, %v997
  %v1002 = vadd.f32 %v978, %v998
  %v1003 = vadd.f32 %v979, %v999
  %v1004 = vadd.f32 %v980, %v1000
  %1005 = vrot.lane.b32.xlu0 %v829, 111
  %v1006 = vpop.permute.xlu0 %1005
  %1007 = vrot.lane.b32.xlu0 %v831, 111
  %v1008 = vpop.permute.xlu0 %1007
  %1009 = vrot.lane.b32.xlu0 %v830, 111
  %v1010 = vpop.permute.xlu0 %1009
  %1011 = vrot.lane.b32.xlu0 %v832, 111
  %v1012 = vpop.permute.xlu0 %1011
  %v1013 = vsel %vm414, %v1006, %v1010
  %v1014 = vsel %vm414, %v1008, %v1012
  %v1015 = vsel %vm414, %v1010, %v1006
  %v1016 = vsel %vm414, %v1012, %v1008
  %v1017 = vmul.f32 %v1013, %v420
  %v1018 = vmul.f32 %v1015, %v421
  %v1019 = vmul.f32 %v1014, %v420
  %v1020 = vmul.f32 %v1016, %v421
  %v1021 = vmul.f32 %v1017, %v430
  %v1022 = vmul.f32 %v1018, %v430
  %v1023 = vmul.f32 %v1019, %v434
  %v1024 = vmul.f32 %v1020, %v434
  %v1025 = vadd.f32 %v1001, %v1021
  %v1026 = vadd.f32 %v1002, %v1022
  %v1027 = vadd.f32 %v1003, %v1023
  %v1028 = vadd.f32 %v1004, %v1024
  %v1029 = vmul.f32 %v829, %v446
  %v1030 = vmul.f32 %v830, %v446
  %v1031 = vmul.f32 %v831, %v450
  %v1032 = vmul.f32 %v832, %v450
  %1033 = vrot.lane.b32.xlu0 %v829, 34
  %v1034 = vpop.permute.xlu0 %1033
  %1035 = vrot.lane.b32.xlu0 %v831, 34
  %v1036 = vpop.permute.xlu0 %1035
  %1037 = vrot.lane.b32.xlu0 %v830, 34
  %v1038 = vpop.permute.xlu0 %1037
  %1039 = vrot.lane.b32.xlu0 %v832, 34
  %v1040 = vpop.permute.xlu0 %1039
  %v1041 = vsel %vm464, %v1034, %v1038
  %v1042 = vsel %vm464, %v1036, %v1040
  %v1043 = vsel %vm464, %v1038, %v1034
  %v1044 = vsel %vm464, %v1040, %v1036
  %v1045 = vmul.f32 %v1043, %v470
  %v1046 = vmul.f32 %v1041, %v471
  %v1047 = vmul.f32 %v1044, %v470
  %v1048 = vmul.f32 %v1042, %v471
  %v1049 = vmul.f32 %v1045, %v480
  %v1050 = vmul.f32 %v1046, %v480
  %v1051 = vmul.f32 %v1047, %v484
  %v1052 = vmul.f32 %v1048, %v484
  %v1053 = vadd.f32 %v1029, %v1049
  %v1054 = vadd.f32 %v1030, %v1050
  %v1055 = vadd.f32 %v1031, %v1051
  %v1056 = vadd.f32 %v1032, %v1052
  %1057 = vrot.lane.b32.xlu0 %v829, 32
  %v1058 = vpop.permute.xlu0 %1057
  %1059 = vrot.lane.b32.xlu0 %v831, 32
  %v1060 = vpop.permute.xlu0 %1059
  %1061 = vrot.lane.b32.xlu0 %v830, 32
  %v1062 = vpop.permute.xlu0 %1061
  %1063 = vrot.lane.b32.xlu0 %v832, 32
  %v1064 = vpop.permute.xlu0 %1063
  %v1065 = vsel %vm502, %v1058, %v1062
  %v1066 = vsel %vm502, %v1060, %v1064
  %v1067 = vsel %vm502, %v1062, %v1058
  %v1068 = vsel %vm502, %v1064, %v1060
  %v1069 = vmul.f32 %v1067, %v508
  %v1070 = vmul.f32 %v1065, %v509
  %v1071 = vmul.f32 %v1068, %v508
  %v1072 = vmul.f32 %v1066, %v509
  %v1073 = vmul.f32 %v1069, %v518
  %v1074 = vmul.f32 %v1070, %v518
  %v1075 = vmul.f32 %v1071, %v522
  %v1076 = vmul.f32 %v1072, %v522
  %v1077 = vadd.f32 %v1053, %v1073
  %v1078 = vadd.f32 %v1054, %v1074
  %v1079 = vadd.f32 %v1055, %v1075
  %v1080 = vadd.f32 %v1056, %v1076
  %1081 = vrot.lane.b32.xlu0 %v829, 30
  %v1082 = vpop.permute.xlu0 %1081
  %1083 = vrot.lane.b32.xlu0 %v831, 30
  %v1084 = vpop.permute.xlu0 %1083
  %1085 = vrot.lane.b32.xlu0 %v830, 30
  %v1086 = vpop.permute.xlu0 %1085
  %1087 = vrot.lane.b32.xlu0 %v832, 30
  %v1088 = vpop.permute.xlu0 %1087
  %v1089 = vsel %vm540, %v1082, %v1086
  %v1090 = vsel %vm540, %v1084, %v1088
  %v1091 = vsel %vm540, %v1086, %v1082
  %v1092 = vsel %vm540, %v1088, %v1084
  %v1093 = vmul.f32 %v1091, %v546
  %v1094 = vmul.f32 %v1089, %v547
  %v1095 = vmul.f32 %v1092, %v546
  %v1096 = vmul.f32 %v1090, %v547
  %v1097 = vmul.f32 %v1093, %v556
  %v1098 = vmul.f32 %v1094, %v556
  %v1099 = vmul.f32 %v1095, %v560
  %v1100 = vmul.f32 %v1096, %v560
  %v1101 = vadd.f32 %v1077, %v1097
  %v1102 = vadd.f32 %v1078, %v1098
  %v1103 = vadd.f32 %v1079, %v1099
  %v1104 = vadd.f32 %v1080, %v1100
  %1105 = vrot.lane.b32.xlu0 %v829, 2
  %v1106 = vpop.permute.xlu0 %1105
  %1107 = vrot.lane.b32.xlu0 %v831, 2
  %v1108 = vpop.permute.xlu0 %1107
  %1109 = vrot.lane.b32.xlu0 %v830, 2
  %v1110 = vpop.permute.xlu0 %1109
  %1111 = vrot.lane.b32.xlu0 %v832, 2
  %v1112 = vpop.permute.xlu0 %1111
  %v1113 = vsel %vm578, %v1106, %v1110
  %v1114 = vsel %vm578, %v1108, %v1112
  %v1115 = vsel %vm578, %v1110, %v1106
  %v1116 = vsel %vm578, %v1112, %v1108
  %v1117 = vmul.f32 %v1115, %v584
  %v1118 = vmul.f32 %v1113, %v585
  %v1119 = vmul.f32 %v1116, %v584
  %v1120 = vmul.f32 %v1114, %v585
  %v1121 = vmul.f32 %v1117, %v594
  %v1122 = vmul.f32 %v1118, %v594
  %v1123 = vmul.f32 %v1119, %v598
  %v1124 = vmul.f32 %v1120, %v598
  %v1125 = vadd.f32 %v1101, %v1121
  %v1126 = vadd.f32 %v1102, %v1122
  %v1127 = vadd.f32 %v1103, %v1123
  %v1128 = vadd.f32 %v1104, %v1124
  %1129 = vrot.lane.b32.xlu0 %v829, 126
  %v1130 = vpop.permute.xlu0 %1129
  %1131 = vrot.lane.b32.xlu0 %v831, 126
  %v1132 = vpop.permute.xlu0 %1131
  %1133 = vrot.lane.b32.xlu0 %v830, 126
  %v1134 = vpop.permute.xlu0 %1133
  %1135 = vrot.lane.b32.xlu0 %v832, 126
  %v1136 = vpop.permute.xlu0 %1135
  %v1137 = vsel %vm616, %v1130, %v1134
  %v1138 = vsel %vm616, %v1132, %v1136
  %v1139 = vsel %vm616, %v1134, %v1130
  %v1140 = vsel %vm616, %v1136, %v1132
  %v1141 = vmul.f32 %v1137, %v622
  %v1142 = vmul.f32 %v1139, %v623
  %v1143 = vmul.f32 %v1138, %v622
  %v1144 = vmul.f32 %v1140, %v623
  %v1145 = vmul.f32 %v1141, %v632
  %v1146 = vmul.f32 %v1142, %v632
  %v1147 = vmul.f32 %v1143, %v636
  %v1148 = vmul.f32 %v1144, %v636
  %v1149 = vadd.f32 %v1125, %v1145
  %v1150 = vadd.f32 %v1126, %v1146
  %v1151 = vadd.f32 %v1127, %v1147
  %v1152 = vadd.f32 %v1128, %v1148
  %1153 = vrot.lane.b32.xlu0 %v829, 98
  %v1154 = vpop.permute.xlu0 %1153
  %1155 = vrot.lane.b32.xlu0 %v831, 98
  %v1156 = vpop.permute.xlu0 %1155
  %1157 = vrot.lane.b32.xlu0 %v830, 98
  %v1158 = vpop.permute.xlu0 %1157
  %1159 = vrot.lane.b32.xlu0 %v832, 98
  %v1160 = vpop.permute.xlu0 %1159
  %v1161 = vsel %vm654, %v1154, %v1158
  %v1162 = vsel %vm654, %v1156, %v1160
  %v1163 = vsel %vm654, %v1158, %v1154
  %v1164 = vsel %vm654, %v1160, %v1156
  %v1165 = vmul.f32 %v1161, %v660
  %v1166 = vmul.f32 %v1163, %v661
  %v1167 = vmul.f32 %v1162, %v660
  %v1168 = vmul.f32 %v1164, %v661
  %v1169 = vmul.f32 %v1165, %v670
  %v1170 = vmul.f32 %v1166, %v670
  %v1171 = vmul.f32 %v1167, %v674
  %v1172 = vmul.f32 %v1168, %v674
  %v1173 = vadd.f32 %v1149, %v1169
  %v1174 = vadd.f32 %v1150, %v1170
  %v1175 = vadd.f32 %v1151, %v1171
  %v1176 = vadd.f32 %v1152, %v1172
  %1177 = vrot.lane.b32.xlu0 %v829, 96
  %v1178 = vpop.permute.xlu0 %1177
  %1179 = vrot.lane.b32.xlu0 %v831, 96
  %v1180 = vpop.permute.xlu0 %1179
  %1181 = vrot.lane.b32.xlu0 %v830, 96
  %v1182 = vpop.permute.xlu0 %1181
  %1183 = vrot.lane.b32.xlu0 %v832, 96
  %v1184 = vpop.permute.xlu0 %1183
  %v1185 = vsel %vm692, %v1178, %v1182
  %v1186 = vsel %vm692, %v1180, %v1184
  %v1187 = vsel %vm692, %v1182, %v1178
  %v1188 = vsel %vm692, %v1184, %v1180
  %v1189 = vmul.f32 %v1185, %v698
  %v1190 = vmul.f32 %v1187, %v699
  %v1191 = vmul.f32 %v1186, %v698
  %v1192 = vmul.f32 %v1188, %v699
  %v1193 = vmul.f32 %v1189, %v708
  %v1194 = vmul.f32 %v1190, %v708
  %v1195 = vmul.f32 %v1191, %v712
  %v1196 = vmul.f32 %v1192, %v712
  %v1197 = vadd.f32 %v1173, %v1193
  %v1198 = vadd.f32 %v1174, %v1194
  %v1199 = vadd.f32 %v1175, %v1195
  %v1200 = vadd.f32 %v1176, %v1196
  %1201 = vrot.lane.b32.xlu0 %v829, 94
  %v1202 = vpop.permute.xlu0 %1201
  %1203 = vrot.lane.b32.xlu0 %v831, 94
  %v1204 = vpop.permute.xlu0 %1203
  %1205 = vrot.lane.b32.xlu0 %v830, 94
  %v1206 = vpop.permute.xlu0 %1205
  %1207 = vrot.lane.b32.xlu0 %v832, 94
  %v1208 = vpop.permute.xlu0 %1207
  %v1209 = vsel %vm730, %v1202, %v1206
  %v1210 = vsel %vm730, %v1204, %v1208
  %v1211 = vsel %vm730, %v1206, %v1202
  %v1212 = vsel %vm730, %v1208, %v1204
  %v1213 = vmul.f32 %v1209, %v736
  %v1214 = vmul.f32 %v1211, %v737
  %v1215 = vmul.f32 %v1210, %v736
  %v1216 = vmul.f32 %v1212, %v737
  %v1217 = vmul.f32 %v1213, %v746
  %v1218 = vmul.f32 %v1214, %v746
  %v1219 = vmul.f32 %v1215, %v750
  %v1220 = vmul.f32 %v1216, %v750
  %v1221 = vadd.f32 %v1197, %v1217
  %v1222 = vadd.f32 %v1198, %v1218
  %v1223 = vadd.f32 %v1199, %v1219
  %v1224 = vadd.f32 %v1200, %v1220
  %s1225 = scalar_lea.vmem %s4, 64
  %1226 = vst [vmem:[%s1225] sm:$0xff] %v1025
  %1227 = vst [vmem:[%s1225 + $0x8] sm:$0xff] %v1026
  %1228 = vst [vmem:[%s1225 + $0x10] sm:$0xff] %v1027
  %1229 = vst [vmem:[%s1225 + $0x18] sm:$0xff] %v1028
  %1230 = vst [vmem:[%s1225 + $0x20] sm:$0xff] %v1221
  %1231 = vst [vmem:[%s1225 + $0x28] sm:$0xff] %v1222
  %1232 = vst [vmem:[%s1225 + $0x30] sm:$0xff] %v1223
  %1233 = vst [vmem:[%s1225 + $0x38] sm:$0xff] %v1224
  %v1234 = vadd.f32 %v1025, %v1026
  %1235 = vadd.xlane.f32.xlu0 %v1234
  %v1236 = vpop.xlane.xlu0 %1235
  %v1237 = vadd.f32 %v1027, %v1028
  %1238 = vadd.xlane.f32.xlu0 %v1237
  %v1239 = vpop.xlane.xlu0 %1238
  %v1240 = vadd.f32 %v774, %v1236
  %v1241 = vadd.f32 %v775, %v1239
  %v1242 = vmul.f32 %v1025, %v1025
  %v1243 = vmul.f32 %v1026, %v1026
  %v1244 = vmul.f32 %v1027, %v1027
  %v1245 = vmul.f32 %v1028, %v1028
  %v1246 = vadd.f32 %v1242, %v1243
  %1247 = vadd.xlane.f32.xlu0 %v1246
  %v1248 = vpop.xlane.xlu0 %1247
  %v1249 = vadd.f32 %v1244, %v1245
  %1250 = vadd.xlane.f32.xlu0 %v1249
  %v1251 = vpop.xlane.xlu0 %1250
  %v1252 = vadd.f32 %v786, %v1248
  %v1253 = vadd.f32 %v787, %v1251
  %v1254 = vadd.f32 %v1221, %v1222
  %1255 = vadd.xlane.f32.xlu0 %v1254
  %v1256 = vpop.xlane.xlu0 %1255
  %v1257 = vadd.f32 %v1223, %v1224
  %1258 = vadd.xlane.f32.xlu0 %v1257
  %v1259 = vpop.xlane.xlu0 %1258
  %v1260 = vadd.f32 %v794, %v1256
  %v1261 = vadd.f32 %v795, %v1259
  %v1262 = vmul.f32 %v1221, %v1221
  %v1263 = vmul.f32 %v1222, %v1222
  %v1264 = vmul.f32 %v1223, %v1223
  %v1265 = vmul.f32 %v1224, %v1224
  %v1266 = vadd.f32 %v1262, %v1263
  %1267 = vadd.xlane.f32.xlu0 %v1266
  %v1268 = vpop.xlane.xlu0 %1267
  %v1269 = vadd.f32 %v1264, %v1265
  %1270 = vadd.xlane.f32.xlu0 %v1269
  %v1271 = vpop.xlane.xlu0 %1270
  %v1272 = vadd.f32 %v806, %v1268
  %v1273 = vadd.f32 %v807, %v1271
  %vm1274 = vcmask 7168
  %v1275 = vsel %vm1274, %v1240, %v1252
  %v1276 = vsel %vm1274, %v1241, %v1253
  %vm1277 = vcmask 15360
  %v1278 = vsel %vm1277, %v1275, %v1260
  %v1279 = vsel %vm1277, %v1276, %v1261
  %vm1280 = vcmask 23552
  %v1281 = vsel %vm1280, %v1278, %v1272
  %v1282 = vsel %vm1280, %v1279, %v1273
  %vm1283 = vcmask 31744
  %1284 = vst.msk [vmem:[%s5] sm:$0xff] %vm1283, %v1281
  %1285 = vst.msk [vmem:[%s5 + $0x8] sm:$0xff] %vm1283, %v1282
  // Predicated region
  $region18: #{context_guided_block.4} parent=0 // pred_check
    _
  $region19: #{context_guided_block.4} parent=0 // pred_check_branch
    %1287 = sbr.rel (0) target = $region21
  $region20: #{context_guided_block.4} parent=0 // pred_region
    _
  $region21: #{context_guided_block.4} parent=0 // pred_fallthru
    _
  // Predicated region
  $region22: #{context_guided_block.4} parent=0 // pred_check
    _
  $region23: #{context_guided_block.4} parent=0 // pred_check_branch
    %1289 = sbr.rel (0) target = $region25
  $region24: #{context_guided_block.4} parent=0 // pred_region
    _
  $region25: #{context_guided_block.4} parent=0 // pred_fallthru
    _
  // Predicated region
  $region26: #{context_guided_block.4} parent=0 // pred_check
    _
  $region27: #{context_guided_block.4} parent=0 // pred_check_branch
    %1291 = sbr.rel (0) target = $region29
  $region28: #{context_guided_block.4} parent=0 // pred_region
    _
  $region29: #{context_guided_block.4} parent=0 // pred_fallthru
    _
  // Predicated region
  $region30: #{context_guided_block.4} parent=0 // pred_check
    _
  $region31: #{context_guided_block.4} parent=0 // pred_check_branch
    %1293 = sbr.rel (0) target = $region33
  $region32: #{context_guided_block.4} parent=0 // pred_region
    _
  $region33: #{context_guided_block.4} parent=0 // pred_fallthru
    _

</llo_original>
